<compile_context>
chip_gen: v7x
topology: tpu7x:2x2x1
jax: 0.10.0
libtpu: 0.0.40
codegen_flags: <defaults>
</compile_context>

<pallas_src>
import jax
import jax.numpy as jnp
from jax import lax
from jax.experimental import pallas as pl
from jax.experimental.pallas import tpu as pltpu

SUBLANE = 8
UNROLL_T_THRESHOLD = 16  # fully unroll the time loop at/below this T


# ------------------------------ fused kernel ---------------------------------
def make_fused_lstm_kernel(T, B_pad, H, num_layers, num_classes):
    use_fori = T > UNROLL_T_THRESHOLD

    def kernel(*refs):
        # refs = [x, (wih_t, whh_t, bias) * L, fc_w_t, fc_b, out, seq_scratch, gx_scratch]
        x_ref = refs[0]
        layer_refs = refs[1:1 + 3 * num_layers]
        fc_w_ref = refs[1 + 3 * num_layers]
        fc_b_ref = refs[2 + 3 * num_layers]
        out_ref = refs[3 + 3 * num_layers]
        seq_ref = refs[4 + 3 * num_layers]   # VMEM (T*B_pad, H): inter-layer hidden seq
        gx_ref = refs[5 + 3 * num_layers]    # VMEM (T*B_pad, 4H): hoisted input proj

        h = None
        for l in range(num_layers):
            wih_t = layer_refs[3 * l + 0][...]      # (D_l, 4H)
            whh_t = layer_refs[3 * l + 1][...]      # (H,   4H)
            bias = layer_refs[3 * l + 2][...]       # (1,   4H)  = b_ih + b_hh

            # Snapshot the previous layer's full sequence BEFORE this layer overwrites
            # seq_ref (read precedes all stores in program order -> no RAW hazard).
            cur = x_ref[...] if l == 0 else seq_ref[...]

            # Hoisted input projection for all T timesteps in ONE MXU matmul,
            # materialized into VMEM scratch (bounds live SSA / vreg pressure).
            gx_ref[...] = jnp.dot(cur, wih_t, preferred_element_type=jnp.float32) + bias

            last_layer = (l == num_layers - 1)

            # TODO(perf): for larger H, keep W_hh staged in MXU weight registers across
            # the time loop (pltpu.matmul_push_rhs / matmul_acc_lhs / matmul_pop) instead
            # of re-streaming the RHS through jnp.dot every step.
            def step(row0, h, c, static):
                if static:
                    gx_t = gx_ref[row0:row0 + B_pad, :]
                else:
                    gx_t = gx_ref[pl.ds(pl.multiple_of(row0, SUBLANE), B_pad), :]
                gates = gx_t + jnp.dot(h, whh_t, preferred_element_type=jnp.float32)
                # Full-width transcendentals: one sigmoid + one tanh over (B_pad, 4H),
                # then take lane slices (PyTorch gate order: i, f, g, o).
                sig = jax.nn.sigmoid(gates)
                th = jnp.tanh(gates)
                i_g = sig[:, 0 * H:1 * H]
                f_g = sig[:, 1 * H:2 * H]
                g_g = th[:, 2 * H:3 * H]
                o_g = sig[:, 3 * H:4 * H]
                c = f_g * c + i_g * g_g
                h = o_g * jnp.tanh(c)
                if not last_layer:
                    if static:
                        seq_ref[row0:row0 + B_pad, :] = h
                    else:
                        seq_ref[pl.ds(pl.multiple_of(row0, SUBLANE), B_pad), :] = h
                return h, c

            h = jnp.zeros((B_pad, H), jnp.float32)
            c = jnp.zeros((B_pad, H), jnp.float32)
            if not use_fori:
                # Small T: fully unrolled static recurrence (scheduler sees everything).
                for t in range(T):
                    h, c = step(t * B_pad, h, c, static=True)
            else:
                # Large T: rolled loop with moderate unroll keeps code size / vreg
                # pressure bounded while preserving LLO scheduling visibility.
                def body(t, carry):
                    return step(t * B_pad, carry[0], carry[1], static=False)

                h, c = lax.fori_loop(0, T, body, (h, c), unroll=8)

        # Final Linear on the last timestep's hidden state of the last layer.
        out_ref[...] = (
            jnp.dot(h, fc_w_ref[...], preferred_element_type=jnp.float32)
            + fc_b_ref[...]
        ).astype(out_ref.dtype)

    return kernel


# ------------------------------- forward -------------------------------------
def lstm_model_forward(params, x_bsd):
    """x_bsd: (batch, seq, input_size) -> (batch, num_classes). One fused pallas_call."""
    B, T, D = x_bsd.shape
    H = params["layers"][0]["whh_t"].shape[0]
    C = params["fc_w_t"].shape[1]
    L = len(params["layers"])

    # Pad batch to the sublane width so every per-step slice is an aligned 8-row block.
    B_pad = ((B + SUBLANE - 1) // SUBLANE) * SUBLANE

    # Time-major, batch zero-padded, flattened: row t*B_pad + b = (timestep t, batch b).
    x_tbd = jnp.transpose(x_bsd, (1, 0, 2)).astype(jnp.float32)     # (T, B, D)
    if B_pad != B:
        x_tbd = jnp.pad(x_tbd, ((0, 0), (0, B_pad - B), (0, 0)))
    x_flat = x_tbd.reshape(T * B_pad, D)

    inputs = [x_flat]
    for lp in params["layers"]:
        inputs += [lp["wih_t"], lp["whh_t"], lp["bias"]]
    inputs += [params["fc_w_t"], params["fc_b"]]

    # VMEM budget from actual residency (inputs + output + scratch slabs) + headroom,
    # instead of a hardcoded cap.  TODO(perf): at production H / L on v7x (64 MiB VMEM),
    # stream per-layer weights with make_async_copy instead of keeping all layers resident.
    in_bytes = sum(int(a.size) * a.dtype.itemsize for a in inputs)
    out_bytes = 4 * B_pad * C
    scratch_bytes = 4 * T * B_pad * H + 4 * T * B_pad * 4 * H
    vmem_limit = 2 * (in_bytes + out_bytes) + scratch_bytes + (2 << 20)
    vmem_limit = int(min(max(vmem_limit, 8 << 20), 64 << 20))

    # Advisory cost estimate so XLA schedules this kernel sensibly.
    flops = 0
    d_in = D
    for _ in range(L):
        flops += 2 * (T * B_pad) * d_in * 4 * H        # hoisted input projection
        flops += T * 2 * B_pad * H * 4 * H             # recurrent matmuls
        flops += T * B_pad * 10 * H                    # gate elementwise math (approx)
        d_in = H
    flops += 2 * B_pad * H * C                         # final FC
    transcendentals = L * T * B_pad * (2 * 4 * H + H)  # full-width sigmoid + tanh + tanh(c)
    bytes_accessed = in_bytes + out_bytes

    out_pad = pl.pallas_call(
        make_fused_lstm_kernel(T, B_pad, H, L, C),
        out_shape=jax.ShapeDtypeStruct((B_pad, C), jnp.float32),
        scratch_shapes=[
            pltpu.VMEM((T * B_pad, H), jnp.float32),        # inter-layer hidden sequence
            pltpu.VMEM((T * B_pad, 4 * H), jnp.float32),    # hoisted input projection gx
        ],
        compiler_params=pltpu.CompilerParams(vmem_limit_bytes=vmem_limit),
        cost_estimate=pl.CostEstimate(
            flops=flops,
            transcendentals=transcendentals,
            bytes_accessed=bytes_accessed,
        ),
    )(*inputs)

    # Drop the padded batch rows.
    return out_pad[:B]


# ------------------------------ params init ----------------------------------
def init_lstm_params(key, input_size, hidden_size, num_layers, num_classes):
    """Deterministic init matching PyTorch shapes: U(-1/sqrt(H), 1/sqrt(H))."""
    # TODO(perf): for production sizes, store wih_t/whh_t/fc_w_t in bf16 (MXU takes bf16
    # with f32 accumulation on v5e/v6e/v7x) to halve weight VMEM residency.
    params = {"layers": []}
    k = 1.0 / jnp.sqrt(jnp.float32(hidden_size))
    for layer in range(num_layers):
        d_in = input_size if layer == 0 else hidden_size
        key, k1, k2, k3, k4 = jax.random.split(key, 5)
        w_ih = jax.random.uniform(k1, (4 * hidden_size, d_in), jnp.float32, -k, k)
        w_hh = jax.random.uniform(k2, (4 * hidden_size, hidden_size), jnp.float32, -k, k)
        b_ih = jax.random.uniform(k3, (4 * hidden_size,), jnp.float32, -k, k)
        b_hh = jax.random.uniform(k4, (4 * hidden_size,), jnp.float32, -k, k)
        params["layers"].append(
            {
                "wih_t": jnp.transpose(w_ih),                 # (d_in, 4H)
                "whh_t": jnp.transpose(w_hh),                 # (H, 4H)
                "bias": (b_ih + b_hh).reshape(1, -1),         # (1, 4H)
            }
        )
    key, k5, k6 = jax.random.split(key, 3)
    kf = 1.0 / jnp.sqrt(jnp.float32(hidden_size))
    w_fc = jax.random.uniform(k5, (num_classes, hidden_size), jnp.float32, -kf, kf)
    b_fc = jax.random.uniform(k6, (num_classes,), jnp.float32, -kf, kf)
    params["fc_w_t"] = jnp.transpose(w_fc)                    # (H, C)
    params["fc_b"] = b_fc.reshape(1, -1)                      # (1, C)
    return params


# ------------------------- pure-JAX reference (check) -------------------------
def lstm_model_ref(params, x_bsd):
    x = jnp.transpose(x_bsd, (1, 0, 2)).astype(jnp.float32)   # (T, B, D)
    for lp in params["layers"]:
        T, B, _ = x.shape
        H = lp["whh_t"].shape[0]
        h = jnp.zeros((B, H), jnp.float32)
        c = jnp.zeros((B, H), jnp.float32)
        outs = []
        for t in range(T):
            gates = x[t] @ lp["wih_t"] + h @ lp["whh_t"] + lp["bias"]
            i = jax.nn.sigmoid(gates[:, 0 * H:1 * H])
            f = jax.nn.sigmoid(gates[:, 1 * H:2 * H])
            g = jnp.tanh(gates[:, 2 * H:3 * H])
            o = jax.nn.sigmoid(gates[:, 3 * H:4 * H])
            c = f * c + i * g
            h = o * jnp.tanh(c)
            outs.append(h)
        x = jnp.stack(outs, axis=0)
    return x[-1] @ params["fc_w_t"] + params["fc_b"]


if __name__ == "__main__":
    batch, seq, input_size = 2, 8, 16
    hidden_size, num_layers, num_classes = 32, 2, 4

    key = jax.random.PRNGKey(0)
    key, kx = jax.random.split(key)
    x = jax.random.normal(kx, (batch, seq, input_size), jnp.float32)

    params = init_lstm_params(key, input_size, hidden_size, num_layers, num_classes)

    out = lstm_model_forward(params, x)
    out = jax.block_until_ready(out)

    ref = lstm_model_ref(params, x)
    assert out.shape == (batch, num_classes)
    assert jnp.allclose(out, ref, atol=1e-4, rtol=1e-4)

    print("KERNEL_OK")
</pallas_src>

<mosaic_0001>
module attributes {stable_mosaic.version = 11 : i64} {
  func.func @kernel(%arg0: memref<64x16xf32, #tpu.memory_space<vmem>>, %arg1: memref<16x128xf32, #tpu.memory_space<vmem>>, %arg2: memref<32x128xf32, #tpu.memory_space<vmem>>, %arg3: memref<1x128xf32, #tpu.memory_space<vmem>>, %arg4: memref<32x128xf32, #tpu.memory_space<vmem>>, %arg5: memref<32x128xf32, #tpu.memory_space<vmem>>, %arg6: memref<1x128xf32, #tpu.memory_space<vmem>>, %arg7: memref<32x4xf32, #tpu.memory_space<vmem>>, %arg8: memref<1x4xf32, #tpu.memory_space<vmem>>, %arg9: memref<8x4xf32, #tpu.memory_space<vmem>>, %arg10: memref<64x32xf32, #tpu.memory_space<vmem>>, %arg11: memref<64x128xf32, #tpu.memory_space<vmem>>) attributes {dimension_semantics = [], scalar_prefetch = 0 : i64, scratch_operands = 2 : i64, tpu.core_type = #tpu.core_type<tc>} {
    %c0 = arith.constant 0 : index
    %c0_0 = arith.constant 0 : index
    %0 = vector.load %arg1[%c0, %c0_0] : memref<16x128xf32, #tpu.memory_space<vmem>>, vector<16x128xf32>
    %c0_1 = arith.constant 0 : index
    %c0_2 = arith.constant 0 : index
    %1 = vector.load %arg2[%c0_1, %c0_2] : memref<32x128xf32, #tpu.memory_space<vmem>>, vector<32x128xf32>
    %c0_3 = arith.constant 0 : index
    %c0_4 = arith.constant 0 : index
    %2 = vector.load %arg3[%c0_3, %c0_4] : memref<1x128xf32, #tpu.memory_space<vmem>>, vector<1x128xf32>
    %c0_5 = arith.constant 0 : index
    %c0_6 = arith.constant 0 : index
    %3 = vector.load %arg0[%c0_5, %c0_6] : memref<64x16xf32, #tpu.memory_space<vmem>>, vector<64x16xf32>
    %cst = arith.constant dense<0.000000e+00> : vector<64x128xf32>
    %4 = tpu.matmul %3, %0, %cst {dimension_numbers = #tpu.dot_dimension_numbers<[1], [0], [0], [1], [0, 0, 1, 1], [], []>} : vector<64x16xf32>, vector<16x128xf32>, vector<64x128xf32> -> vector<64x128xf32>
    %5 = vector.broadcast %2 : vector<1x128xf32> to vector<64x128xf32>
    %6 = arith.addf %4, %5 : vector<64x128xf32>
    %c0_7 = arith.constant 0 : index
    %c0_8 = arith.constant 0 : index
    %7 = vector.load %arg11[%c0_7, %c0_8] : memref<64x128xf32, #tpu.memory_space<vmem>>, vector<64x128xf32>
    tpu.vector_store %arg11[%c0_7, %c0_8], %6 {strides = array<i32>} : memref<64x128xf32, #tpu.memory_space<vmem>>, vector<64x128xf32>,
    %cst_9 = arith.constant 0.000000e+00 : f32
    %8 = vector.broadcast %cst_9 : f32 to vector<8x32xf32>
    %cst_10 = arith.constant 0.000000e+00 : f32
    %9 = vector.broadcast %cst_10 : f32 to vector<8x32xf32>
    %c0_11 = arith.constant 0 : index
    %c0_12 = arith.constant 0 : index
    %10 = vector.load %arg11[%c0_11, %c0_12] : memref<64x128xf32, #tpu.memory_space<vmem>>, vector<8x128xf32>
    %cst_13 = arith.constant dense<0.000000e+00> : vector<8x128xf32>
    %11 = tpu.matmul %8, %1, %cst_13 {dimension_numbers = #tpu.dot_dimension_numbers<[1], [0], [0], [1], [0, 0, 1, 1], [], []>} : vector<8x32xf32>, vector<32x128xf32>, vector<8x128xf32> -> vector<8x128xf32>
    %12 = arith.addf %10, %11 : vector<8x128xf32>
    %13 = arith.negf %12 : vector<8x128xf32>
    %14 = math.exp %13 : vector<8x128xf32>
    %cst_14 = arith.constant 1.000000e+00 : f32
    %15 = vector.broadcast %cst_14 : f32 to vector<8x128xf32>
    %16 = arith.addf %15, %14 : vector<8x128xf32>
    %17 = arith.divf %15, %16 : vector<8x128xf32>
    %18 = math.tanh %12 : vector<8x128xf32>
    %19 = vector.extract_strided_slice %17 {offsets = [0, 0], sizes = [8, 32], strides = [1, 1]} : vector<8x128xf32> to vector<8x32xf32>
    %20 = vector.extract_strided_slice %17 {offsets = [0, 32], sizes = [8, 32], strides = [1, 1]} : vector<8x128xf32> to vector<8x32xf32>
    %21 = vector.extract_strided_slice %18 {offsets = [0, 64], sizes = [8, 32], strides = [1, 1]} : vector<8x128xf32> to vector<8x32xf32>
    %22 = vector.extract_strided_slice %17 {offsets = [0, 96], sizes = [8, 32], strides = [1, 1]} : vector<8x128xf32> to vector<8x32xf32>
    %23 = arith.mulf %20, %9 : vector<8x32xf32>
    %24 = arith.mulf %19, %21 : vector<8x32xf32>
    %25 = arith.addf %23, %24 : vector<8x32xf32>
    %26 = math.tanh %25 : vector<8x32xf32>
    %27 = arith.mulf %22, %26 : vector<8x32xf32>
    %c0_15 = arith.constant 0 : index
    %c0_16 = arith.constant 0 : index
    %28 = vector.load %arg10[%c0_15, %c0_16] : memref<64x32xf32, #tpu.memory_space<vmem>>, vector<8x32xf32>
    tpu.vector_store %arg10[%c0_15, %c0_16], %27 {strides = array<i32>} : memref<64x32xf32, #tpu.memory_space<vmem>>, vector<8x32xf32>,
    %c8 = arith.constant 8 : index
    %c0_17 = arith.constant 0 : index
    %29 = vector.load %arg11[%c8, %c0_17] : memref<64x128xf32, #tpu.memory_space<vmem>>, vector<8x128xf32>
    %cst_18 = arith.constant dense<0.000000e+00> : vector<8x128xf32>
    %30 = tpu.matmul %27, %1, %cst_18 {dimension_numbers = #tpu.dot_dimension_numbers<[1], [0], [0], [1], [0, 0, 1, 1], [], []>} : vector<8x32xf32>, vector<32x128xf32>, vector<8x128xf32> -> vector<8x128xf32>
    %31 = arith.addf %29, %30 : vector<8x128xf32>
    %32 = arith.negf %31 : vector<8x128xf32>
    %33 = math.exp %32 : vector<8x128xf32>
    %cst_19 = arith.constant 1.000000e+00 : f32
    %34 = vector.broadcast %cst_19 : f32 to vector<8x128xf32>
    %35 = arith.addf %34, %33 : vector<8x128xf32>
    %36 = arith.divf %34, %35 : vector<8x128xf32>
    %37 = math.tanh %31 : vector<8x128xf32>
    %38 = vector.extract_strided_slice %36 {offsets = [0, 0], sizes = [8, 32], strides = [1, 1]} : vector<8x128xf32> to vector<8x32xf32>
    %39 = vector.extract_strided_slice %36 {offsets = [0, 32], sizes = [8, 32], strides = [1, 1]} : vector<8x128xf32> to vector<8x32xf32>
    %40 = vector.extract_strided_slice %37 {offsets = [0, 64], sizes = [8, 32], strides = [1, 1]} : vector<8x128xf32> to vector<8x32xf32>
    %41 = vector.extract_strided_slice %36 {offsets = [0, 96], sizes = [8, 32], strides = [1, 1]} : vector<8x128xf32> to vector<8x32xf32>
    %42 = arith.mulf %39, %25 : vector<8x32xf32>
    %43 = arith.mulf %38, %40 : vector<8x32xf32>
    %44 = arith.addf %42, %43 : vector<8x32xf32>
    %45 = math.tanh %44 : vector<8x32xf32>
    %46 = arith.mulf %41, %45 : vector<8x32xf32>
    %c8_20 = arith.constant 8 : index
    %c0_21 = arith.constant 0 : index
    %47 = vector.load %arg10[%c8_20, %c0_21] : memref<64x32xf32, #tpu.memory_space<vmem>>, vector<8x32xf32>
    tpu.vector_store %arg10[%c8_20, %c0_21], %46 {strides = array<i32>} : memref<64x32xf32, #tpu.memory_space<vmem>>, vector<8x32xf32>,
    %c16 = arith.constant 16 : index
    %c0_22 = arith.constant 0 : index
    %48 = vector.load %arg11[%c16, %c0_22] : memref<64x128xf32, #tpu.memory_space<vmem>>, vector<8x128xf32>
    %cst_23 = arith.constant dense<0.000000e+00> : vector<8x128xf32>
    %49 = tpu.matmul %46, %1, %cst_23 {dimension_numbers = #tpu.dot_dimension_numbers<[1], [0], [0], [1], [0, 0, 1, 1], [], []>} : vector<8x32xf32>, vector<32x128xf32>, vector<8x128xf32> -> vector<8x128xf32>
    %50 = arith.addf %48, %49 : vector<8x128xf32>
    %51 = arith.negf %50 : vector<8x128xf32>
    %52 = math.exp %51 : vector<8x128xf32>
    %cst_24 = arith.constant 1.000000e+00 : f32
    %53 = vector.broadcast %cst_24 : f32 to vector<8x128xf32>
    %54 = arith.addf %53, %52 : vector<8x128xf32>
    %55 = arith.divf %53, %54 : vector<8x128xf32>
    %56 = math.tanh %50 : vector<8x128xf32>
    %57 = vector.extract_strided_slice %55 {offsets = [0, 0], sizes = [8, 32], strides = [1, 1]} : vector<8x128xf32> to vector<8x32xf32>
    %58 = vector.extract_strided_slice %55 {offsets = [0, 32], sizes = [8, 32], strides = [1, 1]} : vector<8x128xf32> to vector<8x32xf32>
    %59 = vector.extract_strided_slice %56 {offsets = [0, 64], sizes = [8, 32], strides = [1, 1]} : vector<8x128xf32> to vector<8x32xf32>
    %60 = vector.extract_strided_slice %55 {offsets = [0, 96], sizes = [8, 32], strides = [1, 1]} : vector<8x128xf32> to vector<8x32xf32>
    %61 = arith.mulf %58, %44 : vector<8x32xf32>
    %62 = arith.mulf %57, %59 : vector<8x32xf32>
    %63 = arith.addf %61, %62 : vector<8x32xf32>
    %64 = math.tanh %63 : vector<8x32xf32>
    %65 = arith.mulf %60, %64 : vector<8x32xf32>
    %c16_25 = arith.constant 16 : index
    %c0_26 = arith.constant 0 : index
    %66 = vector.load %arg10[%c16_25, %c0_26] : memref<64x32xf32, #tpu.memory_space<vmem>>, vector<8x32xf32>
    tpu.vector_store %arg10[%c16_25, %c0_26], %65 {strides = array<i32>} : memref<64x32xf32, #tpu.memory_space<vmem>>, vector<8x32xf32>,
    %c24 = arith.constant 24 : index
    %c0_27 = arith.constant 0 : index
    %67 = vector.load %arg11[%c24, %c0_27] : memref<64x128xf32, #tpu.memory_space<vmem>>, vector<8x128xf32>
    %cst_28 = arith.constant dense<0.000000e+00> : vector<8x128xf32>
    %68 = tpu.matmul %65, %1, %cst_28 {dimension_numbers = #tpu.dot_dimension_numbers<[1], [0], [0], [1], [0, 0, 1, 1], [], []>} : vector<8x32xf32>, vector<32x128xf32>, vector<8x128xf32> -> vector<8x128xf32>
    %69 = arith.addf %67, %68 : vector<8x128xf32>
    %70 = arith.negf %69 : vector<8x128xf32>
    %71 = math.exp %70 : vector<8x128xf32>
    %cst_29 = arith.constant 1.000000e+00 : f32
    %72 = vector.broadcast %cst_29 : f32 to vector<8x128xf32>
    %73 = arith.addf %72, %71 : vector<8x128xf32>
    %74 = arith.divf %72, %73 : vector<8x128xf32>
    %75 = math.tanh %69 : vector<8x128xf32>
    %76 = vector.extract_strided_slice %74 {offsets = [0, 0], sizes = [8, 32], strides = [1, 1]} : vector<8x128xf32> to vector<8x32xf32>
    %77 = vector.extract_strided_slice %74 {offsets = [0, 32], sizes = [8, 32], strides = [1, 1]} : vector<8x128xf32> to vector<8x32xf32>
    %78 = vector.extract_strided_slice %75 {offsets = [0, 64], sizes = [8, 32], strides = [1, 1]} : vector<8x128xf32> to vector<8x32xf32>
    %79 = vector.extract_strided_slice %74 {offsets = [0, 96], sizes = [8, 32], strides = [1, 1]} : vector<8x128xf32> to vector<8x32xf32>
    %80 = arith.mulf %77, %63 : vector<8x32xf32>
    %81 = arith.mulf %76, %78 : vector<8x32xf32>
    %82 = arith.addf %80, %81 : vector<8x32xf32>
    %83 = math.tanh %82 : vector<8x32xf32>
    %84 = arith.mulf %79, %83 : vector<8x32xf32>
    %c24_30 = arith.constant 24 : index
    %c0_31 = arith.constant 0 : index
    %85 = vector.load %arg10[%c24_30, %c0_31] : memref<64x32xf32, #tpu.memory_space<vmem>>, vector<8x32xf32>
    tpu.vector_store %arg10[%c24_30, %c0_31], %84 {strides = array<i32>} : memref<64x32xf32, #tpu.memory_space<vmem>>, vector<8x32xf32>,
    %c32 = arith.constant 32 : index
    %c0_32 = arith.constant 0 : index
    %86 = vector.load %arg11[%c32, %c0_32] : memref<64x128xf32, #tpu.memory_space<vmem>>, vector<8x128xf32>
    %cst_33 = arith.constant dense<0.000000e+00> : vector<8x128xf32>
    %87 = tpu.matmul %84, %1, %cst_33 {dimension_numbers = #tpu.dot_dimension_numbers<[1], [0], [0], [1], [0, 0, 1, 1], [], []>} : vector<8x32xf32>, vector<32x128xf32>, vector<8x128xf32> -> vector<8x128xf32>
    %88 = arith.addf %86, %87 : vector<8x128xf32>
    %89 = arith.negf %88 : vector<8x128xf32>
    %90 = math.exp %89 : vector<8x128xf32>
    %cst_34 = arith.constant 1.000000e+00 : f32
    %91 = vector.broadcast %cst_34 : f32 to vector<8x128xf32>
    %92 = arith.addf %91, %90 : vector<8x128xf32>
    %93 = arith.divf %91, %92 : vector<8x128xf32>
    %94 = math.tanh %88 : vector<8x128xf32>
    %95 = vector.extract_strided_slice %93 {offsets = [0, 0], sizes = [8, 32], strides = [1, 1]} : vector<8x128xf32> to vector<8x32xf32>
    %96 = vector.extract_strided_slice %93 {offsets = [0, 32], sizes = [8, 32], strides = [1, 1]} : vector<8x128xf32> to vector<8x32xf32>
    %97 = vector.extract_strided_slice %94 {offsets = [0, 64], sizes = [8, 32], strides = [1, 1]} : vector<8x128xf32> to vector<8x32xf32>
    %98 = vector.extract_strided_slice %93 {offsets = [0, 96], sizes = [8, 32], strides = [1, 1]} : vector<8x128xf32> to vector<8x32xf32>
    %99 = arith.mulf %96, %82 : vector<8x32xf32>
    %100 = arith.mulf %95, %97 : vector<8x32xf32>
    %101 = arith.addf %99, %100 : vector<8x32xf32>
    %102 = math.tanh %101 : vector<8x32xf32>
    %103 = arith.mulf %98, %102 : vector<8x32xf32>
    %c32_35 = arith.constant 32 : index
    %c0_36 = arith.constant 0 : index
    %104 = vector.load %arg10[%c32_35, %c0_36] : memref<64x32xf32, #tpu.memory_space<vmem>>, vector<8x32xf32>
    tpu.vector_store %arg10[%c32_35, %c0_36], %103 {strides = array<i32>} : memref<64x32xf32, #tpu.memory_space<vmem>>, vector<8x32xf32>,
    %c40 = arith.constant 40 : index
    %c0_37 = arith.constant 0 : index
    %105 = vector.load %arg11[%c40, %c0_37] : memref<64x128xf32, #tpu.memory_space<vmem>>, vector<8x128xf32>
    %cst_38 = arith.constant dense<0.000000e+00> : vector<8x128xf32>
    %106 = tpu.matmul %103, %1, %cst_38 {dimension_numbers = #tpu.dot_dimension_numbers<[1], [0], [0], [1], [0, 0, 1, 1], [], []>} : vector<8x32xf32>, vector<32x128xf32>, vector<8x128xf32> -> vector<8x128xf32>
    %107 = arith.addf %105, %106 : vector<8x128xf32>
    %108 = arith.negf %107 : vector<8x128xf32>
    %109 = math.exp %108 : vector<8x128xf32>
    %cst_39 = arith.constant 1.000000e+00 : f32
    %110 = vector.broadcast %cst_39 : f32 to vector<8x128xf32>
    %111 = arith.addf %110, %109 : vector<8x128xf32>
    %112 = arith.divf %110, %111 : vector<8x128xf32>
    %113 = math.tanh %107 : vector<8x128xf32>
    %114 = vector.extract_strided_slice %112 {offsets = [0, 0], sizes = [8, 32], strides = [1, 1]} : vector<8x128xf32> to vector<8x32xf32>
    %115 = vector.extract_strided_slice %112 {offsets = [0, 32], sizes = [8, 32], strides = [1, 1]} : vector<8x128xf32> to vector<8x32xf32>
    %116 = vector.extract_strided_slice %113 {offsets = [0, 64], sizes = [8, 32], strides = [1, 1]} : vector<8x128xf32> to vector<8x32xf32>
    %117 = vector.extract_strided_slice %112 {offsets = [0, 96], sizes = [8, 32], strides = [1, 1]} : vector<8x128xf32> to vector<8x32xf32>
    %118 = arith.mulf %115, %101 : vector<8x32xf32>
    %119 = arith.mulf %114, %116 : vector<8x32xf32>
    %120 = arith.addf %118, %119 : vector<8x32xf32>
    %121 = math.tanh %120 : vector<8x32xf32>
    %122 = arith.mulf %117, %121 : vector<8x32xf32>
    %c40_40 = arith.constant 40 : index
    %c0_41 = arith.constant 0 : index
    %123 = vector.load %arg10[%c40_40, %c0_41] : memref<64x32xf32, #tpu.memory_space<vmem>>, vector<8x32xf32>
    tpu.vector_store %arg10[%c40_40, %c0_41], %122 {strides = array<i32>} : memref<64x32xf32, #tpu.memory_space<vmem>>, vector<8x32xf32>,
    %c48 = arith.constant 48 : index
    %c0_42 = arith.constant 0 : index
    %124 = vector.load %arg11[%c48, %c0_42] : memref<64x128xf32, #tpu.memory_space<vmem>>, vector<8x128xf32>
    %cst_43 = arith.constant dense<0.000000e+00> : vector<8x128xf32>
    %125 = tpu.matmul %122, %1, %cst_43 {dimension_numbers = #tpu.dot_dimension_numbers<[1], [0], [0], [1], [0, 0, 1, 1], [], []>} : vector<8x32xf32>, vector<32x128xf32>, vector<8x128xf32> -> vector<8x128xf32>
    %126 = arith.addf %124, %125 : vector<8x128xf32>
    %127 = arith.negf %126 : vector<8x128xf32>
    %128 = math.exp %127 : vector<8x128xf32>
    %cst_44 = arith.constant 1.000000e+00 : f32
    %129 = vector.broadcast %cst_44 : f32 to vector<8x128xf32>
    %130 = arith.addf %129, %128 : vector<8x128xf32>
    %131 = arith.divf %129, %130 : vector<8x128xf32>
    %132 = math.tanh %126 : vector<8x128xf32>
    %133 = vector.extract_strided_slice %131 {offsets = [0, 0], sizes = [8, 32], strides = [1, 1]} : vector<8x128xf32> to vector<8x32xf32>
    %134 = vector.extract_strided_slice %131 {offsets = [0, 32], sizes = [8, 32], strides = [1, 1]} : vector<8x128xf32> to vector<8x32xf32>
    %135 = vector.extract_strided_slice %132 {offsets = [0, 64], sizes = [8, 32], strides = [1, 1]} : vector<8x128xf32> to vector<8x32xf32>
    %136 = vector.extract_strided_slice %131 {offsets = [0, 96], sizes = [8, 32], strides = [1, 1]} : vector<8x128xf32> to vector<8x32xf32>
    %137 = arith.mulf %134, %120 : vector<8x32xf32>
    %138 = arith.mulf %133, %135 : vector<8x32xf32>
    %139 = arith.addf %137, %138 : vector<8x32xf32>
    %140 = math.tanh %139 : vector<8x32xf32>
    %141 = arith.mulf %136, %140 : vector<8x32xf32>
    %c48_45 = arith.constant 48 : index
    %c0_46 = arith.constant 0 : index
    %142 = vector.load %arg10[%c48_45, %c0_46] : memref<64x32xf32, #tpu.memory_space<vmem>>, vector<8x32xf32>
    tpu.vector_store %arg10[%c48_45, %c0_46], %141 {strides = array<i32>} : memref<64x32xf32, #tpu.memory_space<vmem>>, vector<8x32xf32>,
    %c56 = arith.constant 56 : index
    %c0_47 = arith.constant 0 : index
    %143 = vector.load %arg11[%c56, %c0_47] : memref<64x128xf32, #tpu.memory_space<vmem>>, vector<8x128xf32>
    %cst_48 = arith.constant dense<0.000000e+00> : vector<8x128xf32>
    %144 = tpu.matmul %141, %1, %cst_48 {dimension_numbers = #tpu.dot_dimension_numbers<[1], [0], [0], [1], [0, 0, 1, 1], [], []>} : vector<8x32xf32>, vector<32x128xf32>, vector<8x128xf32> -> vector<8x128xf32>
    %145 = arith.addf %143, %144 : vector<8x128xf32>
    %146 = arith.negf %145 : vector<8x128xf32>
    %147 = math.exp %146 : vector<8x128xf32>
    %cst_49 = arith.constant 1.000000e+00 : f32
    %148 = vector.broadcast %cst_49 : f32 to vector<8x128xf32>
    %149 = arith.addf %148, %147 : vector<8x128xf32>
    %150 = arith.divf %148, %149 : vector<8x128xf32>
    %151 = math.tanh %145 : vector<8x128xf32>
    %152 = vector.extract_strided_slice %150 {offsets = [0, 0], sizes = [8, 32], strides = [1, 1]} : vector<8x128xf32> to vector<8x32xf32>
    %153 = vector.extract_strided_slice %150 {offsets = [0, 32], sizes = [8, 32], strides = [1, 1]} : vector<8x128xf32> to vector<8x32xf32>
    %154 = vector.extract_strided_slice %151 {offsets = [0, 64], sizes = [8, 32], strides = [1, 1]} : vector<8x128xf32> to vector<8x32xf32>
    %155 = vector.extract_strided_slice %150 {offsets = [0, 96], sizes = [8, 32], strides = [1, 1]} : vector<8x128xf32> to vector<8x32xf32>
    %156 = arith.mulf %153, %139 : vector<8x32xf32>
    %157 = arith.mulf %152, %154 : vector<8x32xf32>
    %158 = arith.addf %156, %157 : vector<8x32xf32>
    %159 = math.tanh %158 : vector<8x32xf32>
    %160 = arith.mulf %155, %159 : vector<8x32xf32>
    %c56_50 = arith.constant 56 : index
    %c0_51 = arith.constant 0 : index
    %161 = vector.load %arg10[%c56_50, %c0_51] : memref<64x32xf32, #tpu.memory_space<vmem>>, vector<8x32xf32>
    tpu.vector_store %arg10[%c56_50, %c0_51], %160 {strides = array<i32>} : memref<64x32xf32, #tpu.memory_space<vmem>>, vector<8x32xf32>,
    %c0_52 = arith.constant 0 : index
    %c0_53 = arith.constant 0 : index
    %162 = vector.load %arg4[%c0_52, %c0_53] : memref<32x128xf32, #tpu.memory_space<vmem>>, vector<32x128xf32>
    %c0_54 = arith.constant 0 : index
    %c0_55 = arith.constant 0 : index
    %163 = vector.load %arg5[%c0_54, %c0_55] : memref<32x128xf32, #tpu.memory_space<vmem>>, vector<32x128xf32>
    %c0_56 = arith.constant 0 : index
    %c0_57 = arith.constant 0 : index
    %164 = vector.load %arg6[%c0_56, %c0_57] : memref<1x128xf32, #tpu.memory_space<vmem>>, vector<1x128xf32>
    %c0_58 = arith.constant 0 : index
    %c0_59 = arith.constant 0 : index
    %165 = vector.load %arg10[%c0_58, %c0_59] : memref<64x32xf32, #tpu.memory_space<vmem>>, vector<64x32xf32>
    %cst_60 = arith.constant dense<0.000000e+00> : vector<64x128xf32>
    %166 = tpu.matmul %165, %162, %cst_60 {dimension_numbers = #tpu.dot_dimension_numbers<[1], [0], [0], [1], [0, 0, 1, 1], [], []>} : vector<64x32xf32>, vector<32x128xf32>, vector<64x128xf32> -> vector<64x128xf32>
    %167 = vector.broadcast %164 : vector<1x128xf32> to vector<64x128xf32>
    %168 = arith.addf %166, %167 : vector<64x128xf32>
    %c0_61 = arith.constant 0 : index
    %c0_62 = arith.constant 0 : index
    %169 = vector.load %arg11[%c0_61, %c0_62] : memref<64x128xf32, #tpu.memory_space<vmem>>, vector<64x128xf32>
    tpu.vector_store %arg11[%c0_61, %c0_62], %168 {strides = array<i32>} : memref<64x128xf32, #tpu.memory_space<vmem>>, vector<64x128xf32>,
    %cst_63 = arith.constant 0.000000e+00 : f32
    %170 = vector.broadcast %cst_63 : f32 to vector<8x32xf32>
    %cst_64 = arith.constant 0.000000e+00 : f32
    %171 = vector.broadcast %cst_64 : f32 to vector<8x32xf32>
    %c0_65 = arith.constant 0 : index
    %c0_66 = arith.constant 0 : index
    %172 = vector.load %arg11[%c0_65, %c0_66] : memref<64x128xf32, #tpu.memory_space<vmem>>, vector<8x128xf32>
    %cst_67 = arith.constant dense<0.000000e+00> : vector<8x128xf32>
    %173 = tpu.matmul %170, %163, %cst_67 {dimension_numbers = #tpu.dot_dimension_numbers<[1], [0], [0], [1], [0, 0, 1, 1], [], []>} : vector<8x32xf32>, vector<32x128xf32>, vector<8x128xf32> -> vector<8x128xf32>
    %174 = arith.addf %172, %173 : vector<8x128xf32>
    %175 = arith.negf %174 : vector<8x128xf32>
    %176 = math.exp %175 : vector<8x128xf32>
    %cst_68 = arith.constant 1.000000e+00 : f32
    %177 = vector.broadcast %cst_68 : f32 to vector<8x128xf32>
    %178 = arith.addf %177, %176 : vector<8x128xf32>
    %179 = arith.divf %177, %178 : vector<8x128xf32>
    %180 = math.tanh %174 : vector<8x128xf32>
    %181 = vector.extract_strided_slice %179 {offsets = [0, 0], sizes = [8, 32], strides = [1, 1]} : vector<8x128xf32> to vector<8x32xf32>
    %182 = vector.extract_strided_slice %179 {offsets = [0, 32], sizes = [8, 32], strides = [1, 1]} : vector<8x128xf32> to vector<8x32xf32>
    %183 = vector.extract_strided_slice %180 {offsets = [0, 64], sizes = [8, 32], strides = [1, 1]} : vector<8x128xf32> to vector<8x32xf32>
    %184 = vector.extract_strided_slice %179 {offsets = [0, 96], sizes = [8, 32], strides = [1, 1]} : vector<8x128xf32> to vector<8x32xf32>
    %185 = arith.mulf %182, %171 : vector<8x32xf32>
    %186 = arith.mulf %181, %183 : vector<8x32xf32>
    %187 = arith.addf %185, %186 : vector<8x32xf32>
    %188 = math.tanh %187 : vector<8x32xf32>
    %189 = arith.mulf %184, %188 : vector<8x32xf32>
    %c8_69 = arith.constant 8 : index
    %c0_70 = arith.constant 0 : index
    %190 = vector.load %arg11[%c8_69, %c0_70] : memref<64x128xf32, #tpu.memory_space<vmem>>, vector<8x128xf32>
    %cst_71 = arith.constant dense<0.000000e+00> : vector<8x128xf32>
    %191 = tpu.matmul %189, %163, %cst_71 {dimension_numbers = #tpu.dot_dimension_numbers<[1], [0], [0], [1], [0, 0, 1, 1], [], []>} : vector<8x32xf32>, vector<32x128xf32>, vector<8x128xf32> -> vector<8x128xf32>
    %192 = arith.addf %190, %191 : vector<8x128xf32>
    %193 = arith.negf %192 : vector<8x128xf32>
    %194 = math.exp %193 : vector<8x128xf32>
    %cst_72 = arith.constant 1.000000e+00 : f32
    %195 = vector.broadcast %cst_72 : f32 to vector<8x128xf32>
    %196 = arith.addf %195, %194 : vector<8x128xf32>
    %197 = arith.divf %195, %196 : vector<8x128xf32>
    %198 = math.tanh %192 : vector<8x128xf32>
    %199 = vector.extract_strided_slice %197 {offsets = [0, 0], sizes = [8, 32], strides = [1, 1]} : vector<8x128xf32> to vector<8x32xf32>
    %200 = vector.extract_strided_slice %197 {offsets = [0, 32], sizes = [8, 32], strides = [1, 1]} : vector<8x128xf32> to vector<8x32xf32>
    %201 = vector.extract_strided_slice %198 {offsets = [0, 64], sizes = [8, 32], strides = [1, 1]} : vector<8x128xf32> to vector<8x32xf32>
    %202 = vector.extract_strided_slice %197 {offsets = [0, 96], sizes = [8, 32], strides = [1, 1]} : vector<8x128xf32> to vector<8x32xf32>
    %203 = arith.mulf %200, %187 : vector<8x32xf32>
    %204 = arith.mulf %199, %201 : vector<8x32xf32>
    %205 = arith.addf %203, %204 : vector<8x32xf32>
    %206 = math.tanh %205 : vector<8x32xf32>
    %207 = arith.mulf %202, %206 : vector<8x32xf32>
    %c16_73 = arith.constant 16 : index
    %c0_74 = arith.constant 0 : index
    %208 = vector.load %arg11[%c16_73, %c0_74] : memref<64x128xf32, #tpu.memory_space<vmem>>, vector<8x128xf32>
    %cst_75 = arith.constant dense<0.000000e+00> : vector<8x128xf32>
    %209 = tpu.matmul %207, %163, %cst_75 {dimension_numbers = #tpu.dot_dimension_numbers<[1], [0], [0], [1], [0, 0, 1, 1], [], []>} : vector<8x32xf32>, vector<32x128xf32>, vector<8x128xf32> -> vector<8x128xf32>
    %210 = arith.addf %208, %209 : vector<8x128xf32>
    %211 = arith.negf %210 : vector<8x128xf32>
    %212 = math.exp %211 : vector<8x128xf32>
    %cst_76 = arith.constant 1.000000e+00 : f32
    %213 = vector.broadcast %cst_76 : f32 to vector<8x128xf32>
    %214 = arith.addf %213, %212 : vector<8x128xf32>
    %215 = arith.divf %213, %214 : vector<8x128xf32>
    %216 = math.tanh %210 : vector<8x128xf32>
    %217 = vector.extract_strided_slice %215 {offsets = [0, 0], sizes = [8, 32], strides = [1, 1]} : vector<8x128xf32> to vector<8x32xf32>
    %218 = vector.extract_strided_slice %215 {offsets = [0, 32], sizes = [8, 32], strides = [1, 1]} : vector<8x128xf32> to vector<8x32xf32>
    %219 = vector.extract_strided_slice %216 {offsets = [0, 64], sizes = [8, 32], strides = [1, 1]} : vector<8x128xf32> to vector<8x32xf32>
    %220 = vector.extract_strided_slice %215 {offsets = [0, 96], sizes = [8, 32], strides = [1, 1]} : vector<8x128xf32> to vector<8x32xf32>
    %221 = arith.mulf %218, %205 : vector<8x32xf32>
    %222 = arith.mulf %217, %219 : vector<8x32xf32>
    %223 = arith.addf %221, %222 : vector<8x32xf32>
    %224 = math.tanh %223 : vector<8x32xf32>
    %225 = arith.mulf %220, %224 : vector<8x32xf32>
    %c24_77 = arith.constant 24 : index
    %c0_78 = arith.constant 0 : index
    %226 = vector.load %arg11[%c24_77, %c0_78] : memref<64x128xf32, #tpu.memory_space<vmem>>, vector<8x128xf32>
    %cst_79 = arith.constant dense<0.000000e+00> : vector<8x128xf32>
    %227 = tpu.matmul %225, %163, %cst_79 {dimension_numbers = #tpu.dot_dimension_numbers<[1], [0], [0], [1], [0, 0, 1, 1], [], []>} : vector<8x32xf32>, vector<32x128xf32>, vector<8x128xf32> -> vector<8x128xf32>
    %228 = arith.addf %226, %227 : vector<8x128xf32>
    %229 = arith.negf %228 : vector<8x128xf32>
    %230 = math.exp %229 : vector<8x128xf32>
    %cst_80 = arith.constant 1.000000e+00 : f32
    %231 = vector.broadcast %cst_80 : f32 to vector<8x128xf32>
    %232 = arith.addf %231, %230 : vector<8x128xf32>
    %233 = arith.divf %231, %232 : vector<8x128xf32>
    %234 = math.tanh %228 : vector<8x128xf32>
    %235 = vector.extract_strided_slice %233 {offsets = [0, 0], sizes = [8, 32], strides = [1, 1]} : vector<8x128xf32> to vector<8x32xf32>
    %236 = vector.extract_strided_slice %233 {offsets = [0, 32], sizes = [8, 32], strides = [1, 1]} : vector<8x128xf32> to vector<8x32xf32>
    %237 = vector.extract_strided_slice %234 {offsets = [0, 64], sizes = [8, 32], strides = [1, 1]} : vector<8x128xf32> to vector<8x32xf32>
    %238 = vector.extract_strided_slice %233 {offsets = [0, 96], sizes = [8, 32], strides = [1, 1]} : vector<8x128xf32> to vector<8x32xf32>
    %239 = arith.mulf %236, %223 : vector<8x32xf32>
    %240 = arith.mulf %235, %237 : vector<8x32xf32>
    %241 = arith.addf %239, %240 : vector<8x32xf32>
    %242 = math.tanh %241 : vector<8x32xf32>
    %243 = arith.mulf %238, %242 : vector<8x32xf32>
    %c32_81 = arith.constant 32 : index
    %c0_82 = arith.constant 0 : index
    %244 = vector.load %arg11[%c32_81, %c0_82] : memref<64x128xf32, #tpu.memory_space<vmem>>, vector<8x128xf32>
    %cst_83 = arith.constant dense<0.000000e+00> : vector<8x128xf32>
    %245 = tpu.matmul %243, %163, %cst_83 {dimension_numbers = #tpu.dot_dimension_numbers<[1], [0], [0], [1], [0, 0, 1, 1], [], []>} : vector<8x32xf32>, vector<32x128xf32>, vector<8x128xf32> -> vector<8x128xf32>
    %246 = arith.addf %244, %245 : vector<8x128xf32>
    %247 = arith.negf %246 : vector<8x128xf32>
    %248 = math.exp %247 : vector<8x128xf32>
    %cst_84 = arith.constant 1.000000e+00 : f32
    %249 = vector.broadcast %cst_84 : f32 to vector<8x128xf32>
    %250 = arith.addf %249, %248 : vector<8x128xf32>
    %251 = arith.divf %249, %250 : vector<8x128xf32>
    %252 = math.tanh %246 : vector<8x128xf32>
    %253 = vector.extract_strided_slice %251 {offsets = [0, 0], sizes = [8, 32], strides = [1, 1]} : vector<8x128xf32> to vector<8x32xf32>
    %254 = vector.extract_strided_slice %251 {offsets = [0, 32], sizes = [8, 32], strides = [1, 1]} : vector<8x128xf32> to vector<8x32xf32>
    %255 = vector.extract_strided_slice %252 {offsets = [0, 64], sizes = [8, 32], strides = [1, 1]} : vector<8x128xf32> to vector<8x32xf32>
    %256 = vector.extract_strided_slice %251 {offsets = [0, 96], sizes = [8, 32], strides = [1, 1]} : vector<8x128xf32> to vector<8x32xf32>
    %257 = arith.mulf %254, %241 : vector<8x32xf32>
    %258 = arith.mulf %253, %255 : vector<8x32xf32>
    %259 = arith.addf %257, %258 : vector<8x32xf32>
    %260 = math.tanh %259 : vector<8x32xf32>
    %261 = arith.mulf %256, %260 : vector<8x32xf32>
    %c40_85 = arith.constant 40 : index
    %c0_86 = arith.constant 0 : index
    %262 = vector.load %arg11[%c40_85, %c0_86] : memref<64x128xf32, #tpu.memory_space<vmem>>, vector<8x128xf32>
    %cst_87 = arith.constant dense<0.000000e+00> : vector<8x128xf32>
    %263 = tpu.matmul %261, %163, %cst_87 {dimension_numbers = #tpu.dot_dimension_numbers<[1], [0], [0], [1], [0, 0, 1, 1], [], []>} : vector<8x32xf32>, vector<32x128xf32>, vector<8x128xf32> -> vector<8x128xf32>
    %264 = arith.addf %262, %263 : vector<8x128xf32>
    %265 = arith.negf %264 : vector<8x128xf32>
    %266 = math.exp %265 : vector<8x128xf32>
    %cst_88 = arith.constant 1.000000e+00 : f32
    %267 = vector.broadcast %cst_88 : f32 to vector<8x128xf32>
    %268 = arith.addf %267, %266 : vector<8x128xf32>
    %269 = arith.divf %267, %268 : vector<8x128xf32>
    %270 = math.tanh %264 : vector<8x128xf32>
    %271 = vector.extract_strided_slice %269 {offsets = [0, 0], sizes = [8, 32], strides = [1, 1]} : vector<8x128xf32> to vector<8x32xf32>
    %272 = vector.extract_strided_slice %269 {offsets = [0, 32], sizes = [8, 32], strides = [1, 1]} : vector<8x128xf32> to vector<8x32xf32>
    %273 = vector.extract_strided_slice %270 {offsets = [0, 64], sizes = [8, 32], strides = [1, 1]} : vector<8x128xf32> to vector<8x32xf32>
    %274 = vector.extract_strided_slice %269 {offsets = [0, 96], sizes = [8, 32], strides = [1, 1]} : vector<8x128xf32> to vector<8x32xf32>
    %275 = arith.mulf %272, %259 : vector<8x32xf32>
    %276 = arith.mulf %271, %273 : vector<8x32xf32>
    %277 = arith.addf %275, %276 : vector<8x32xf32>
    %278 = math.tanh %277 : vector<8x32xf32>
    %279 = arith.mulf %274, %278 : vector<8x32xf32>
    %c48_89 = arith.constant 48 : index
    %c0_90 = arith.constant 0 : index
    %280 = vector.load %arg11[%c48_89, %c0_90] : memref<64x128xf32, #tpu.memory_space<vmem>>, vector<8x128xf32>
    %cst_91 = arith.constant dense<0.000000e+00> : vector<8x128xf32>
    %281 = tpu.matmul %279, %163, %cst_91 {dimension_numbers = #tpu.dot_dimension_numbers<[1], [0], [0], [1], [0, 0, 1, 1], [], []>} : vector<8x32xf32>, vector<32x128xf32>, vector<8x128xf32> -> vector<8x128xf32>
    %282 = arith.addf %280, %281 : vector<8x128xf32>
    %283 = arith.negf %282 : vector<8x128xf32>
    %284 = math.exp %283 : vector<8x128xf32>
    %cst_92 = arith.constant 1.000000e+00 : f32
    %285 = vector.broadcast %cst_92 : f32 to vector<8x128xf32>
    %286 = arith.addf %285, %284 : vector<8x128xf32>
    %287 = arith.divf %285, %286 : vector<8x128xf32>
    %288 = math.tanh %282 : vector<8x128xf32>
    %289 = vector.extract_strided_slice %287 {offsets = [0, 0], sizes = [8, 32], strides = [1, 1]} : vector<8x128xf32> to vector<8x32xf32>
    %290 = vector.extract_strided_slice %287 {offsets = [0, 32], sizes = [8, 32], strides = [1, 1]} : vector<8x128xf32> to vector<8x32xf32>
    %291 = vector.extract_strided_slice %288 {offsets = [0, 64], sizes = [8, 32], strides = [1, 1]} : vector<8x128xf32> to vector<8x32xf32>
    %292 = vector.extract_strided_slice %287 {offsets = [0, 96], sizes = [8, 32], strides = [1, 1]} : vector<8x128xf32> to vector<8x32xf32>
    %293 = arith.mulf %290, %277 : vector<8x32xf32>
    %294 = arith.mulf %289, %291 : vector<8x32xf32>
    %295 = arith.addf %293, %294 : vector<8x32xf32>
    %296 = math.tanh %295 : vector<8x32xf32>
    %297 = arith.mulf %292, %296 : vector<8x32xf32>
    %c56_93 = arith.constant 56 : index
    %c0_94 = arith.constant 0 : index
    %298 = vector.load %arg11[%c56_93, %c0_94] : memref<64x128xf32, #tpu.memory_space<vmem>>, vector<8x128xf32>
    %cst_95 = arith.constant dense<0.000000e+00> : vector<8x128xf32>
    %299 = tpu.matmul %297, %163, %cst_95 {dimension_numbers = #tpu.dot_dimension_numbers<[1], [0], [0], [1], [0, 0, 1, 1], [], []>} : vector<8x32xf32>, vector<32x128xf32>, vector<8x128xf32> -> vector<8x128xf32>
    %300 = arith.addf %298, %299 : vector<8x128xf32>
    %301 = arith.negf %300 : vector<8x128xf32>
    %302 = math.exp %301 : vector<8x128xf32>
    %cst_96 = arith.constant 1.000000e+00 : f32
    %303 = vector.broadcast %cst_96 : f32 to vector<8x128xf32>
    %304 = arith.addf %303, %302 : vector<8x128xf32>
    %305 = arith.divf %303, %304 : vector<8x128xf32>
    %306 = math.tanh %300 : vector<8x128xf32>
    %307 = vector.extract_strided_slice %305 {offsets = [0, 0], sizes = [8, 32], strides = [1, 1]} : vector<8x128xf32> to vector<8x32xf32>
    %308 = vector.extract_strided_slice %305 {offsets = [0, 32], sizes = [8, 32], strides = [1, 1]} : vector<8x128xf32> to vector<8x32xf32>
    %309 = vector.extract_strided_slice %306 {offsets = [0, 64], sizes = [8, 32], strides = [1, 1]} : vector<8x128xf32> to vector<8x32xf32>
    %310 = vector.extract_strided_slice %305 {offsets = [0, 96], sizes = [8, 32], strides = [1, 1]} : vector<8x128xf32> to vector<8x32xf32>
    %311 = arith.mulf %308, %295 : vector<8x32xf32>
    %312 = arith.mulf %307, %309 : vector<8x32xf32>
    %313 = arith.addf %311, %312 : vector<8x32xf32>
    %314 = math.tanh %313 : vector<8x32xf32>
    %315 = arith.mulf %310, %314 : vector<8x32xf32>
    %c0_97 = arith.constant 0 : index
    %c0_98 = arith.constant 0 : index
    %316 = vector.load %arg7[%c0_97, %c0_98] : memref<32x4xf32, #tpu.memory_space<vmem>>, vector<32x4xf32>
    %cst_99 = arith.constant dense<0.000000e+00> : vector<8x4xf32>
    %317 = tpu.matmul %315, %316, %cst_99 {dimension_numbers = #tpu.dot_dimension_numbers<[1], [0], [0], [1], [0, 0, 1, 1], [], []>} : vector<8x32xf32>, vector<32x4xf32>, vector<8x4xf32> -> vector<8x4xf32>
    %c0_100 = arith.constant 0 : index
    %c0_101 = arith.constant 0 : index
    %318 = vector.load %arg8[%c0_100, %c0_101] : memref<1x4xf32, #tpu.memory_space<vmem>>, vector<1x4xf32>
    %319 = vector.broadcast %318 : vector<1x4xf32> to vector<8x4xf32>
    %320 = arith.addf %317, %319 : vector<8x4xf32>
    %c0_102 = arith.constant 0 : index
    %c0_103 = arith.constant 0 : index
    %321 = vector.load %arg9[%c0_102, %c0_103] : memref<8x4xf32, #tpu.memory_space<vmem>>, vector<8x4xf32>
    tpu.vector_store %arg9[%c0_102, %c0_103], %320 {strides = array<i32>} : memref<8x4xf32, #tpu.memory_space<vmem>>, vector<8x4xf32>,
    return
  }
}

</mosaic_0001>

<llo_original>
// kernel: tpu_custom_call.1
$region0: #{tpu_custom_call.1}
  #allocation0 [shape = 'u32[]', space=smem, size = 0x4, offset = 0x4, fixed_abs, tag = 'smem constant byte address 0x4 - core index']
  #allocation1 [shape = 'u32[144,128]{1,0:T(1,128)}', space=vmem, size = 0x12000, scoped, tag = 'internal scratch']
  #allocation2 [shape = 'f32[64,32]{1,0:T(8,128)}', space=vmem, size = 0x8000, scoped, tag = 'scratch operand']
  #allocation3 [shape = 'f32[64,128]{1,0:T(8,128)}', space=vmem, size = 0x8000, scoped, tag = 'scratch operand']
  %s0 = inlined_call_operand.vmem [shape: f32[64,16], index: 0, kind: input, shape index: {}]
  %s1 = inlined_call_operand.vmem [shape: f32[16,128], index: 1, kind: input, shape index: {}]
  %s2 = inlined_call_operand.vmem [shape: f32[32,128], index: 2, kind: input, shape index: {}]
  %s3 = inlined_call_operand.vmem [shape: f32[1,128], index: 3, kind: input, shape index: {}]
  %s4 = inlined_call_operand.vmem [shape: f32[32,128], index: 4, kind: input, shape index: {}]
  %s5 = inlined_call_operand.vmem [shape: f32[32,128], index: 5, kind: input, shape index: {}]
  %s6 = inlined_call_operand.vmem [shape: f32[1,128], index: 6, kind: input, shape index: {}]
  %s7 = inlined_call_operand.vmem [shape: f32[32,4], index: 7, kind: input, shape index: {}]
  %s8 = inlined_call_operand.vmem [shape: f32[1,4], index: 8, kind: input, shape index: {}]
  %s9 = inlined_call_operand.vmem [shape: f32[8,4], index: 9, kind: output, shape index: {}]
  %s10 = sld [smem:[#allocation0]]
  $region46: #{tpu_custom_call.1} parent=0
    _
  %s12 = ssub.s32 1, %s10
  %s13 = scalar_select 0, %s12, %s10
  // Predicated region
  $region2: #{tpu_custom_call.1} parent=0 // pred_check
    _
  $region3: #{tpu_custom_call.1} parent=0 // pred_check_branch
    %15 = sbr.rel (0) target = $region5
  $region4: #{tpu_custom_call.1} parent=0 // pred_region
    _
  $region5: #{tpu_custom_call.1} parent=0 // pred_fallthru
    _
  // Predicated region
  $region6: #{tpu_custom_call.1} parent=0 // pred_check
    _
  $region7: #{tpu_custom_call.1} parent=0 // pred_check_branch
    %17 = sbr.rel (0) target = $region9
  $region8: #{tpu_custom_call.1} parent=0 // pred_region
    _
  $region9: #{tpu_custom_call.1} parent=0 // pred_fallthru
    _
  // Predicated region
  $region10: #{tpu_custom_call.1} parent=0 // pred_check
    _
  $region11: #{tpu_custom_call.1} parent=0 // pred_check_branch
    %19 = sbr.rel (0) target = $region13
  $region12: #{tpu_custom_call.1} parent=0 // pred_region
    _
  $region13: #{tpu_custom_call.1} parent=0 // pred_fallthru
    _
  // Predicated region
  $region14: #{tpu_custom_call.1} parent=0 // pred_check
    _
  $region15: #{tpu_custom_call.1} parent=0 // pred_check_branch
    %21 = sbr.rel (0) target = $region17
  $region16: #{tpu_custom_call.1} parent=0 // pred_region
    _
  $region17: #{tpu_custom_call.1} parent=0 // pred_fallthru
    _
  // Predicated region
  $region18: #{tpu_custom_call.1} parent=0 // pred_check
    _
  $region19: #{tpu_custom_call.1} parent=0 // pred_check_branch
    %23 = sbr.rel (0) target = $region21
  $region20: #{tpu_custom_call.1} parent=0 // pred_region
    _
  $region21: #{tpu_custom_call.1} parent=0 // pred_fallthru
    _
  // Predicated region
  $region22: #{tpu_custom_call.1} parent=0 // pred_check
    _
  $region23: #{tpu_custom_call.1} parent=0 // pred_check_branch
    %25 = sbr.rel (0) target = $region25
  $region24: #{tpu_custom_call.1} parent=0 // pred_region
    _
  $region25: #{tpu_custom_call.1} parent=0 // pred_fallthru
    _
  // Predicated region
  $region26: #{tpu_custom_call.1} parent=0 // pred_check
    _
  $region27: #{tpu_custom_call.1} parent=0 // pred_check_branch
    %27 = sbr.rel (0) target = $region29
  $region28: #{tpu_custom_call.1} parent=0 // pred_region
    _
  $region29: #{tpu_custom_call.1} parent=0 // pred_fallthru
    _
  // Predicated region
  $region30: #{tpu_custom_call.1} parent=0 // pred_check
    _
  $region31: #{tpu_custom_call.1} parent=0 // pred_check_branch
    %29 = sbr.rel (0) target = $region33
  $region32: #{tpu_custom_call.1} parent=0 // pred_region
    _
  $region33: #{tpu_custom_call.1} parent=0 // pred_fallthru
    _
  // Predicated region
  $region34: #{tpu_custom_call.1} parent=0 // pred_check
    _
  $region35: #{tpu_custom_call.1} parent=0 // pred_check_branch
    %31 = sbr.rel (0) target = $region37
  $region36: #{tpu_custom_call.1} parent=0 // pred_region
    _
  $region37: #{tpu_custom_call.1} parent=0 // pred_fallthru
    _
  %v32 = vld [vmem:[%s1] sm:$0xff]
  %v33 = vld [vmem:[%s1 + $0x8] sm:$0xff]
  %v34 = vld [vmem:[%s2] sm:$0xff]
  %v35 = vld [vmem:[%s2 + $0x8] sm:$0xff]
  %v36 = vld [vmem:[%s2 + $0x10] sm:$0xff]
  %v37 = vld [vmem:[%s2 + $0x18] sm:$0xff]
  %v38 = vld [vmem:[%s3] sm:$0x1]
  %v39 = vld [vmem:[%s0] sm:$0xff]
  %v40 = vld [vmem:[%s0 + $0x8] sm:$0xff]
  %v41 = vld [vmem:[%s0 + $0x10] sm:$0xff]
  %v42 = vld [vmem:[%s0 + $0x18] sm:$0xff]
  %v43 = vld [vmem:[%s0 + $0x20] sm:$0xff]
  %v44 = vld [vmem:[%s0 + $0x28] sm:$0xff]
  %v45 = vld [vmem:[%s0 + $0x30] sm:$0xff]
  %v46 = vld [vmem:[%s0 + $0x38] sm:$0xff]
  %v48 = vlaneseq
  %v49 = vshrl.u32 %v48, 7
  %v50 = vsub.s32 0, %v49
  %v51 = vrot.slane %v38, %v50
  %vm53 = vcmask 130048
  %v55 = vsel %vm53, %v39, 0
  %v58 = vsel %vm53, %v40, 0
  %v61 = vsel %vm53, %v41, 0
  %v64 = vsel %vm53, %v42, 0
  %v67 = vsel %vm53, %v43, 0
  %v70 = vsel %vm53, %v44, 0
  %v73 = vsel %vm53, %v45, 0
  %v76 = vsel %vm53, %v46, 0
  %78 = vmatprep.subr.mxu0 0.0
  %79 = vmatpush1.msra.mxu0 %v32
  %80 = vmatprep.subr.mxu0 0.0
  %81 = vmatpush1.msra.mxu0 %v33
  %82 = vmatprep.subr.mxu0 0.0
  %83 = vmatpush1.msra.mxu0 0.0
  %84 = vmatprep.subr.mxu0 0.0
  %85 = vmatpush1.msra.mxu0 0.0
  %86 = vmatprep.subr.mxu0 0.0
  %87 = vmatpush1.msra.mxu0 0.0
  %88 = vmatprep.subr.mxu0 0.0
  %89 = vmatpush1.msra.mxu0 0.0
  %90 = vmatprep.subr.mxu0 0.0
  %91 = vmatpush1.msra.mxu0 0.0
  %92 = vmatprep.subr.mxu0 0.0
  %93 = vmatpush1.msra.mxu0 0.0
  %94 = vmatprep.subr.mxu0 0.0
  %95 = vmatpush1.msra.mxu0 0.0
  %96 = vmatprep.subr.mxu0 0.0
  %97 = vmatpush1.msra.mxu0 0.0
  %98 = vmatprep.subr.mxu0 0.0
  %99 = vmatpush1.msra.mxu0 0.0
  %100 = vmatprep.subr.mxu0 0.0
  %101 = vmatpush1.msra.mxu0 0.0
  %102 = vmatprep.subr.mxu0 0.0
  %103 = vmatpush1.msra.mxu0 0.0
  %104 = vmatprep.subr.mxu0 0.0
  %105 = vmatpush1.msra.mxu0 0.0
  %106 = vmatprep.subr.mxu0 0.0
  %107 = vmatpush1.msra.mxu0 0.0
  %108 = vmatprep.subr.mxu0 0.0
  %109 = vmatpush1.msra.mxu0 0.0
  %110 = vmatprep.subr.mxu0 0.0
  %111 = vmatpush1.msra.mxu0 0.0
  %112 = vmatprep.subr.mxu0 0.0
  %113 = vmatpush1.msra.mxu0 0.0
  %114 = vmatprep.subr.mxu0 0.0
  %115 = vmatpush1.msra.mxu0 0.0
  %116 = vmatprep.subr.mxu0 0.0
  %117 = vmatpush1.msra.mxu0 0.0
  %118 = vmatprep.subr.mxu0 0.0
  %119 = vmatpush1.msra.mxu0 0.0
  %120 = vmatprep.subr.mxu0 0.0
  %121 = vmatpush1.msra.mxu0 0.0
  %122 = vmatprep.subr.mxu0 0.0
  %123 = vmatpush1.msra.mxu0 0.0
  %124 = vmatprep.subr.mxu0 0.0
  %125 = vmatpush1.msra.mxu0 0.0
  %126 = vmatprep.subr.mxu0 0.0
  %127 = vmatpush1.msra.mxu0 0.0
  %128 = vmatprep.subr.mxu0 0.0
  %129 = vmatpush1.msra.mxu0 0.0
  %130 = vmatprep.subr.mxu0 0.0
  %131 = vmatpush1.msra.mxu0 0.0
  %132 = vmatprep.subr.mxu0 0.0
  %133 = vmatpush1.msra.mxu0 0.0
  %134 = vmatprep.subr.mxu0 0.0
  %135 = vmatpush1.msra.mxu0 0.0
  %136 = vmatprep.subr.mxu0 0.0
  %137 = vmatpush1.msra.mxu0 0.0
  %138 = vmatprep.subr.mxu0 0.0
  %139 = vmatpush1.msra.mxu0 0.0
  %140 = vmatprep.subr.mxu0 0.0
  %141 = vmatpush1.msra.mxu0 0.0
  %142 = vmatprep.mubr.f32.mxu0 0.0
  %143 = vmatmul.mubr.f32.gmra.mrb[0].mxu0 %v55
  %v144 = vpop.f32.mrb[0].mxu0
  %v145 = vadd.f32 %v51, %v144
  %v146 = vpop.f32.mrb[0].mxu0
  %147 = vmatprep.mubr.f32.mxu0 0.0
  %148 = vmatmul.mubr.f32.gmra.mrb[0].mxu0 %v58
  %v149 = vpop.f32.mrb[0].mxu0
  %v150 = vadd.f32 %v51, %v149
  %v151 = vpop.f32.mrb[0].mxu0
  %152 = vmatprep.mubr.f32.mxu0 0.0
  %153 = vmatmul.mubr.f32.gmra.mrb[0].mxu0 %v61
  %v154 = vpop.f32.mrb[0].mxu0
  %v155 = vadd.f32 %v51, %v154
  %v156 = vpop.f32.mrb[0].mxu0
  %157 = vmatprep.mubr.f32.mxu0 0.0
  %158 = vmatmul.mubr.f32.gmra.mrb[0].mxu0 %v64
  %v159 = vpop.f32.mrb[0].mxu0
  %v160 = vadd.f32 %v51, %v159
  %v161 = vpop.f32.mrb[0].mxu0
  %162 = vmatprep.mubr.f32.mxu0 0.0
  %163 = vmatmul.mubr.f32.gmra.mrb[0].mxu0 %v67
  %v164 = vpop.f32.mrb[0].mxu0
  %v165 = vadd.f32 %v51, %v164
  %v166 = vpop.f32.mrb[0].mxu0
  %167 = vmatprep.mubr.f32.mxu0 0.0
  %168 = vmatmul.mubr.f32.gmra.mrb[0].mxu0 %v70
  %v169 = vpop.f32.mrb[0].mxu0
  %v170 = vadd.f32 %v51, %v169
  %v171 = vpop.f32.mrb[0].mxu0
  %172 = vmatprep.mubr.f32.mxu0 0.0
  %173 = vmatmul.mubr.f32.gmra.mrb[0].mxu0 %v73
  %v174 = vpop.f32.mrb[0].mxu0
  %v175 = vadd.f32 %v51, %v174
  %v176 = vpop.f32.mrb[0].mxu0
  %177 = vmatprep.mubr.f32.mxu0 0.0
  %178 = vmatmul.mubr.f32.gmra.mrb[0].mxu0 %v76
  %v179 = vpop.f32.mrb[0].mxu0
  %v180 = vadd.f32 %v51, %v179
  %v181 = vpop.f32.mrb[0].mxu0
  %182 = vdwg.mxu0
  %183 = vst [vmem:[#allocation3] sm:$0xff] %v145
  %184 = vst [vmem:[#allocation3 + $0x8] sm:$0xff] %v150
  %185 = vst [vmem:[#allocation3 + $0x10] sm:$0xff] %v155
  %186 = vst [vmem:[#allocation3 + $0x18] sm:$0xff] %v160
  %187 = vst [vmem:[#allocation3 + $0x20] sm:$0xff] %v165
  %188 = vst [vmem:[#allocation3 + $0x28] sm:$0xff] %v170
  %189 = vst [vmem:[#allocation3 + $0x30] sm:$0xff] %v175
  %190 = vst [vmem:[#allocation3 + $0x38] sm:$0xff] %v180
  %v191 = vld [vmem:[#allocation3] sm:$0xff]
  %vm192 = vcmask 261120
  %v194 = vsel %vm192, 0.0, 0
  %196 = vmatprep.subr.mxu0 0.0
  %197 = vmatpush1.msra.mxu0 %v34
  %198 = vmatprep.subr.mxu0 0.0
  %199 = vmatpush1.msra.mxu0 %v35
  %200 = vmatprep.subr.mxu0 0.0
  %201 = vmatpush1.msra.mxu0 %v36
  %202 = vmatprep.subr.mxu0 0.0
  %203 = vmatpush1.msra.mxu0 %v37
  %204 = vmatprep.subr.mxu0 0.0
  %205 = vmatpush1.msra.mxu0 0.0
  %206 = vmatprep.subr.mxu0 0.0
  %207 = vmatpush1.msra.mxu0 0.0
  %208 = vmatprep.subr.mxu0 0.0
  %209 = vmatpush1.msra.mxu0 0.0
  %210 = vmatprep.subr.mxu0 0.0
  %211 = vmatpush1.msra.mxu0 0.0
  %212 = vmatprep.subr.mxu0 0.0
  %213 = vmatpush1.msra.mxu0 0.0
  %214 = vmatprep.subr.mxu0 0.0
  %215 = vmatpush1.msra.mxu0 0.0
  %216 = vmatprep.subr.mxu0 0.0
  %217 = vmatpush1.msra.mxu0 0.0
  %218 = vmatprep.subr.mxu0 0.0
  %219 = vmatpush1.msra.mxu0 0.0
  %220 = vmatprep.subr.mxu0 0.0
  %221 = vmatpush1.msra.mxu0 0.0
  %222 = vmatprep.subr.mxu0 0.0
  %223 = vmatpush1.msra.mxu0 0.0
  %224 = vmatprep.subr.mxu0 0.0
  %225 = vmatpush1.msra.mxu0 0.0
  %226 = vmatprep.subr.mxu0 0.0
  %227 = vmatpush1.msra.mxu0 0.0
  %228 = vmatprep.subr.mxu0 0.0
  %229 = vmatpush1.msra.mxu0 0.0
  %230 = vmatprep.subr.mxu0 0.0
  %231 = vmatpush1.msra.mxu0 0.0
  %232 = vmatprep.subr.mxu0 0.0
  %233 = vmatpush1.msra.mxu0 0.0
  %234 = vmatprep.subr.mxu0 0.0
  %235 = vmatpush1.msra.mxu0 0.0
  %236 = vmatprep.subr.mxu0 0.0
  %237 = vmatpush1.msra.mxu0 0.0
  %238 = vmatprep.subr.mxu0 0.0
  %239 = vmatpush1.msra.mxu0 0.0
  %240 = vmatprep.subr.mxu0 0.0
  %241 = vmatpush1.msra.mxu0 0.0
  %242 = vmatprep.subr.mxu0 0.0
  %243 = vmatpush1.msra.mxu0 0.0
  %244 = vmatprep.subr.mxu0 0.0
  %245 = vmatpush1.msra.mxu0 0.0
  %246 = vmatprep.subr.mxu0 0.0
  %247 = vmatpush1.msra.mxu0 0.0
  %248 = vmatprep.subr.mxu0 0.0
  %249 = vmatpush1.msra.mxu0 0.0
  %250 = vmatprep.subr.mxu0 0.0
  %251 = vmatpush1.msra.mxu0 0.0
  %252 = vmatprep.subr.mxu0 0.0
  %253 = vmatpush1.msra.mxu0 0.0
  %254 = vmatprep.subr.mxu0 0.0
  %255 = vmatpush1.msra.mxu0 0.0
  %256 = vmatprep.subr.mxu0 0.0
  %257 = vmatpush1.msra.mxu0 0.0
  %258 = vmatprep.subr.mxu0 0.0
  %259 = vmatpush1.msra.mxu0 0.0
  %260 = vmatprep.mubr.f32.mxu0 0.0
  %261 = vmatmul.mubr.f32.gmra.mrb[0].mxu0 %v194
  %v262 = vpop.f32.mrb[0].mxu0
  %v263 = vadd.f32 0.0, %v262
  %v264 = vpop.f32.mrb[0].mxu0
  %265 = vdwg.mxu0
  %v266 = vadd.f32 %v191, %v263
  %v267 = vxor.u32 %v266, 2147483648
  %v268 = vmul.f32 %v267, 1.442695
  %v269 = vpow.pop %v268
  %v270 = vadd.f32 %v269, 1.0
  %v271 = vrcp.pop %v270
  %v272 = vmul.f32 1.0, %v271
  %v273 = vtanh.pop %v266
  %v274 = vmul.f32 %v272, 0.0
  %276 = vrot.lane.b32.xlu0 %v273, 64
  %v277 = vpop.permute.xlu0 %276
  %v279 = vmul.f32 %v272, %v277
  %281 = vrot.lane.b32.xlu0 %v279, 32
  %v282 = vpop.permute.xlu0 %281
  %v284 = vadd.f32 %v274, %v282
  %v285 = vtanh.pop %v284
  %287 = vrot.lane.b32.xlu0 %v285, 64
  %v288 = vpop.permute.xlu0 %287
  %v290 = vmul.f32 %v272, %v288
  %292 = vrot.lane.b32.xlu0 %v290, 32
  %v293 = vpop.permute.xlu0 %292
  %295 = vst.msk [vmem:[#allocation2] sm:$0xff] %vm192, %v293
  %v296 = vld [vmem:[#allocation3 + $0x8] sm:$0xff]
  %v297 = vsel %vm192, %v293, 0
  %299 = vmatprep.subr.mxu0 0.0
  %300 = vmatpush1.msra.mxu0 %v34
  %301 = vmatprep.subr.mxu0 0.0
  %302 = vmatpush1.msra.mxu0 %v35
  %303 = vmatprep.subr.mxu0 0.0
  %304 = vmatpush1.msra.mxu0 %v36
  %305 = vmatprep.subr.mxu0 0.0
  %306 = vmatpush1.msra.mxu0 %v37
  %307 = vmatprep.subr.mxu0 0.0
  %308 = vmatpush1.msra.mxu0 0.0
  %309 = vmatprep.subr.mxu0 0.0
  %310 = vmatpush1.msra.mxu0 0.0
  %311 = vmatprep.subr.mxu0 0.0
  %312 = vmatpush1.msra.mxu0 0.0
  %313 = vmatprep.subr.mxu0 0.0
  %314 = vmatpush1.msra.mxu0 0.0
  %315 = vmatprep.subr.mxu0 0.0
  %316 = vmatpush1.msra.mxu0 0.0
  %317 = vmatprep.subr.mxu0 0.0
  %318 = vmatpush1.msra.mxu0 0.0
  %319 = vmatprep.subr.mxu0 0.0
  %320 = vmatpush1.msra.mxu0 0.0
  %321 = vmatprep.subr.mxu0 0.0
  %322 = vmatpush1.msra.mxu0 0.0
  %323 = vmatprep.subr.mxu0 0.0
  %324 = vmatpush1.msra.mxu0 0.0
  %325 = vmatprep.subr.mxu0 0.0
  %326 = vmatpush1.msra.mxu0 0.0
  %327 = vmatprep.subr.mxu0 0.0
  %328 = vmatpush1.msra.mxu0 0.0
  %329 = vmatprep.subr.mxu0 0.0
  %330 = vmatpush1.msra.mxu0 0.0
  %331 = vmatprep.subr.mxu0 0.0
  %332 = vmatpush1.msra.mxu0 0.0
  %333 = vmatprep.subr.mxu0 0.0
  %334 = vmatpush1.msra.mxu0 0.0
  %335 = vmatprep.subr.mxu0 0.0
  %336 = vmatpush1.msra.mxu0 0.0
  %337 = vmatprep.subr.mxu0 0.0
  %338 = vmatpush1.msra.mxu0 0.0
  %339 = vmatprep.subr.mxu0 0.0
  %340 = vmatpush1.msra.mxu0 0.0
  %341 = vmatprep.subr.mxu0 0.0
  %342 = vmatpush1.msra.mxu0 0.0
  %343 = vmatprep.subr.mxu0 0.0
  %344 = vmatpush1.msra.mxu0 0.0
  %345 = vmatprep.subr.mxu0 0.0
  %346 = vmatpush1.msra.mxu0 0.0
  %347 = vmatprep.subr.mxu0 0.0
  %348 = vmatpush1.msra.mxu0 0.0
  %349 = vmatprep.subr.mxu0 0.0
  %350 = vmatpush1.msra.mxu0 0.0
  %351 = vmatprep.subr.mxu0 0.0
  %352 = vmatpush1.msra.mxu0 0.0
  %353 = vmatprep.subr.mxu0 0.0
  %354 = vmatpush1.msra.mxu0 0.0
  %355 = vmatprep.subr.mxu0 0.0
  %356 = vmatpush1.msra.mxu0 0.0
  %357 = vmatprep.subr.mxu0 0.0
  %358 = vmatpush1.msra.mxu0 0.0
  %359 = vmatprep.subr.mxu0 0.0
  %360 = vmatpush1.msra.mxu0 0.0
  %361 = vmatprep.subr.mxu0 0.0
  %362 = vmatpush1.msra.mxu0 0.0
  %363 = vmatprep.mubr.f32.mxu0 0.0
  %364 = vmatmul.mubr.f32.gmra.mrb[0].mxu0 %v297
  %v365 = vpop.f32.mrb[0].mxu0
  %v366 = vadd.f32 0.0, %v365
  %v367 = vpop.f32.mrb[0].mxu0
  %368 = vdwg.mxu0
  %v369 = vadd.f32 %v296, %v366
  %v370 = vxor.u32 %v369, 2147483648
  %v371 = vmul.f32 %v370, 1.442695
  %v372 = vpow.pop %v371
  %v373 = vadd.f32 %v372, 1.0
  %v374 = vrcp.pop %v373
  %v375 = vmul.f32 1.0, %v374
  %v376 = vtanh.pop %v369
  %v377 = vmul.f32 %v375, %v284
  %379 = vrot.lane.b32.xlu0 %v376, 64
  %v380 = vpop.permute.xlu0 %379
  %v382 = vmul.f32 %v375, %v380
  %384 = vrot.lane.b32.xlu0 %v382, 32
  %v385 = vpop.permute.xlu0 %384
  %v387 = vadd.f32 %v377, %v385
  %v388 = vtanh.pop %v387
  %390 = vrot.lane.b32.xlu0 %v388, 64
  %v391 = vpop.permute.xlu0 %390
  %v393 = vmul.f32 %v375, %v391
  %395 = vrot.lane.b32.xlu0 %v393, 32
  %v396 = vpop.permute.xlu0 %395
  %398 = vst.msk [vmem:[#allocation2 + $0x8] sm:$0xff] %vm192, %v396
  %v399 = vld [vmem:[#allocation3 + $0x10] sm:$0xff]
  %v400 = vsel %vm192, %v396, 0
  %402 = vmatprep.subr.mxu0 0.0
  %403 = vmatpush1.msra.mxu0 %v34
  %404 = vmatprep.subr.mxu0 0.0
  %405 = vmatpush1.msra.mxu0 %v35
  %406 = vmatprep.subr.mxu0 0.0
  %407 = vmatpush1.msra.mxu0 %v36
  %408 = vmatprep.subr.mxu0 0.0
  %409 = vmatpush1.msra.mxu0 %v37
  %410 = vmatprep.subr.mxu0 0.0
  %411 = vmatpush1.msra.mxu0 0.0
  %412 = vmatprep.subr.mxu0 0.0
  %413 = vmatpush1.msra.mxu0 0.0
  %414 = vmatprep.subr.mxu0 0.0
  %415 = vmatpush1.msra.mxu0 0.0
  %416 = vmatprep.subr.mxu0 0.0
  %417 = vmatpush1.msra.mxu0 0.0
  %418 = vmatprep.subr.mxu0 0.0
  %419 = vmatpush1.msra.mxu0 0.0
  %420 = vmatprep.subr.mxu0 0.0
  %421 = vmatpush1.msra.mxu0 0.0
  %422 = vmatprep.subr.mxu0 0.0
  %423 = vmatpush1.msra.mxu0 0.0
  %424 = vmatprep.subr.mxu0 0.0
  %425 = vmatpush1.msra.mxu0 0.0
  %426 = vmatprep.subr.mxu0 0.0
  %427 = vmatpush1.msra.mxu0 0.0
  %428 = vmatprep.subr.mxu0 0.0
  %429 = vmatpush1.msra.mxu0 0.0
  %430 = vmatprep.subr.mxu0 0.0
  %431 = vmatpush1.msra.mxu0 0.0
  %432 = vmatprep.subr.mxu0 0.0
  %433 = vmatpush1.msra.mxu0 0.0
  %434 = vmatprep.subr.mxu0 0.0
  %435 = vmatpush1.msra.mxu0 0.0
  %436 = vmatprep.subr.mxu0 0.0
  %437 = vmatpush1.msra.mxu0 0.0
  %438 = vmatprep.subr.mxu0 0.0
  %439 = vmatpush1.msra.mxu0 0.0
  %440 = vmatprep.subr.mxu0 0.0
  %441 = vmatpush1.msra.mxu0 0.0
  %442 = vmatprep.subr.mxu0 0.0
  %443 = vmatpush1.msra.mxu0 0.0
  %444 = vmatprep.subr.mxu0 0.0
  %445 = vmatpush1.msra.mxu0 0.0
  %446 = vmatprep.subr.mxu0 0.0
  %447 = vmatpush1.msra.mxu0 0.0
  %448 = vmatprep.subr.mxu0 0.0
  %449 = vmatpush1.msra.mxu0 0.0
  %450 = vmatprep.subr.mxu0 0.0
  %451 = vmatpush1.msra.mxu0 0.0
  %452 = vmatprep.subr.mxu0 0.0
  %453 = vmatpush1.msra.mxu0 0.0
  %454 = vmatprep.subr.mxu0 0.0
  %455 = vmatpush1.msra.mxu0 0.0
  %456 = vmatprep.subr.mxu0 0.0
  %457 = vmatpush1.msra.mxu0 0.0
  %458 = vmatprep.subr.mxu0 0.0
  %459 = vmatpush1.msra.mxu0 0.0
  %460 = vmatprep.subr.mxu0 0.0
  %461 = vmatpush1.msra.mxu0 0.0
  %462 = vmatprep.subr.mxu0 0.0
  %463 = vmatpush1.msra.mxu0 0.0
  %464 = vmatprep.subr.mxu0 0.0
  %465 = vmatpush1.msra.mxu0 0.0
  %466 = vmatprep.mubr.f32.mxu0 0.0
  %467 = vmatmul.mubr.f32.gmra.mrb[0].mxu0 %v400
  %v468 = vpop.f32.mrb[0].mxu0
  %v469 = vadd.f32 0.0, %v468
  %v470 = vpop.f32.mrb[0].mxu0
  %471 = vdwg.mxu0
  %v472 = vadd.f32 %v399, %v469
  %v473 = vxor.u32 %v472, 2147483648
  %v474 = vmul.f32 %v473, 1.442695
  %v475 = vpow.pop %v474
  %v476 = vadd.f32 %v475, 1.0
  %v477 = vrcp.pop %v476
  %v478 = vmul.f32 1.0, %v477
  %v479 = vtanh.pop %v472
  %v480 = vmul.f32 %v478, %v387
  %482 = vrot.lane.b32.xlu0 %v479, 64
  %v483 = vpop.permute.xlu0 %482
  %v485 = vmul.f32 %v478, %v483
  %487 = vrot.lane.b32.xlu0 %v485, 32
  %v488 = vpop.permute.xlu0 %487
  %v490 = vadd.f32 %v480, %v488
  %v491 = vtanh.pop %v490
  %493 = vrot.lane.b32.xlu0 %v491, 64
  %v494 = vpop.permute.xlu0 %493
  %v496 = vmul.f32 %v478, %v494
  %498 = vrot.lane.b32.xlu0 %v496, 32
  %v499 = vpop.permute.xlu0 %498
  %501 = vst.msk [vmem:[#allocation2 + $0x10] sm:$0xff] %vm192, %v499
  %v502 = vld [vmem:[#allocation3 + $0x18] sm:$0xff]
  %v503 = vsel %vm192, %v499, 0
  %505 = vmatprep.subr.mxu0 0.0
  %506 = vmatpush1.msra.mxu0 %v34
  %507 = vmatprep.subr.mxu0 0.0
  %508 = vmatpush1.msra.mxu0 %v35
  %509 = vmatprep.subr.mxu0 0.0
  %510 = vmatpush1.msra.mxu0 %v36
  %511 = vmatprep.subr.mxu0 0.0
  %512 = vmatpush1.msra.mxu0 %v37
  %513 = vmatprep.subr.mxu0 0.0
  %514 = vmatpush1.msra.mxu0 0.0
  %515 = vmatprep.subr.mxu0 0.0
  %516 = vmatpush1.msra.mxu0 0.0
  %517 = vmatprep.subr.mxu0 0.0
  %518 = vmatpush1.msra.mxu0 0.0
  %519 = vmatprep.subr.mxu0 0.0
  %520 = vmatpush1.msra.mxu0 0.0
  %521 = vmatprep.subr.mxu0 0.0
  %522 = vmatpush1.msra.mxu0 0.0
  %523 = vmatprep.subr.mxu0 0.0
  %524 = vmatpush1.msra.mxu0 0.0
  %525 = vmatprep.subr.mxu0 0.0
  %526 = vmatpush1.msra.mxu0 0.0
  %527 = vmatprep.subr.mxu0 0.0
  %528 = vmatpush1.msra.mxu0 0.0
  %529 = vmatprep.subr.mxu0 0.0
  %530 = vmatpush1.msra.mxu0 0.0
  %531 = vmatprep.subr.mxu0 0.0
  %532 = vmatpush1.msra.mxu0 0.0
  %533 = vmatprep.subr.mxu0 0.0
  %534 = vmatpush1.msra.mxu0 0.0
  %535 = vmatprep.subr.mxu0 0.0
  %536 = vmatpush1.msra.mxu0 0.0
  %537 = vmatprep.subr.mxu0 0.0
  %538 = vmatpush1.msra.mxu0 0.0
  %539 = vmatprep.subr.mxu0 0.0
  %540 = vmatpush1.msra.mxu0 0.0
  %541 = vmatprep.subr.mxu0 0.0
  %542 = vmatpush1.msra.mxu0 0.0
  %543 = vmatprep.subr.mxu0 0.0
  %544 = vmatpush1.msra.mxu0 0.0
  %545 = vmatprep.subr.mxu0 0.0
  %546 = vmatpush1.msra.mxu0 0.0
  %547 = vmatprep.subr.mxu0 0.0
  %548 = vmatpush1.msra.mxu0 0.0
  %549 = vmatprep.subr.mxu0 0.0
  %550 = vmatpush1.msra.mxu0 0.0
  %551 = vmatprep.subr.mxu0 0.0
  %552 = vmatpush1.msra.mxu0 0.0
  %553 = vmatprep.subr.mxu0 0.0
  %554 = vmatpush1.msra.mxu0 0.0
  %555 = vmatprep.subr.mxu0 0.0
  %556 = vmatpush1.msra.mxu0 0.0
  %557 = vmatprep.subr.mxu0 0.0
  %558 = vmatpush1.msra.mxu0 0.0
  %559 = vmatprep.subr.mxu0 0.0
  %560 = vmatpush1.msra.mxu0 0.0
  %561 = vmatprep.subr.mxu0 0.0
  %562 = vmatpush1.msra.mxu0 0.0
  %563 = vmatprep.subr.mxu0 0.0
  %564 = vmatpush1.msra.mxu0 0.0
  %565 = vmatprep.subr.mxu0 0.0
  %566 = vmatpush1.msra.mxu0 0.0
  %567 = vmatprep.subr.mxu0 0.0
  %568 = vmatpush1.msra.mxu0 0.0
  %569 = vmatprep.mubr.f32.mxu0 0.0
  %570 = vmatmul.mubr.f32.gmra.mrb[0].mxu0 %v503
  %v571 = vpop.f32.mrb[0].mxu0
  %v572 = vadd.f32 0.0, %v571
  %v573 = vpop.f32.mrb[0].mxu0
  %574 = vdwg.mxu0
  %v575 = vadd.f32 %v502, %v572
  %v576 = vxor.u32 %v575, 2147483648
  %v577 = vmul.f32 %v576, 1.442695
  %v578 = vpow.pop %v577
  %v579 = vadd.f32 %v578, 1.0
  %v580 = vrcp.pop %v579
  %v581 = vmul.f32 1.0, %v580
  %v582 = vtanh.pop %v575
  %v583 = vmul.f32 %v581, %v490
  %585 = vrot.lane.b32.xlu0 %v582, 64
  %v586 = vpop.permute.xlu0 %585
  %v588 = vmul.f32 %v581, %v586
  %590 = vrot.lane.b32.xlu0 %v588, 32
  %v591 = vpop.permute.xlu0 %590
  %v593 = vadd.f32 %v583, %v591
  %v594 = vtanh.pop %v593
  %596 = vrot.lane.b32.xlu0 %v594, 64
  %v597 = vpop.permute.xlu0 %596
  %v599 = vmul.f32 %v581, %v597
  %601 = vrot.lane.b32.xlu0 %v599, 32
  %v602 = vpop.permute.xlu0 %601
  %604 = vst.msk [vmem:[#allocation2 + $0x18] sm:$0xff] %vm192, %v602
  %v605 = vld [vmem:[#allocation3 + $0x20] sm:$0xff]
  %v606 = vsel %vm192, %v602, 0
  %608 = vmatprep.subr.mxu0 0.0
  %609 = vmatpush1.msra.mxu0 %v34
  %610 = vmatprep.subr.mxu0 0.0
  %611 = vmatpush1.msra.mxu0 %v35
  %612 = vmatprep.subr.mxu0 0.0
  %613 = vmatpush1.msra.mxu0 %v36
  %614 = vmatprep.subr.mxu0 0.0
  %615 = vmatpush1.msra.mxu0 %v37
  %616 = vmatprep.subr.mxu0 0.0
  %617 = vmatpush1.msra.mxu0 0.0
  %618 = vmatprep.subr.mxu0 0.0
  %619 = vmatpush1.msra.mxu0 0.0
  %620 = vmatprep.subr.mxu0 0.0
  %621 = vmatpush1.msra.mxu0 0.0
  %622 = vmatprep.subr.mxu0 0.0
  %623 = vmatpush1.msra.mxu0 0.0
  %624 = vmatprep.subr.mxu0 0.0
  %625 = vmatpush1.msra.mxu0 0.0
  %626 = vmatprep.subr.mxu0 0.0
  %627 = vmatpush1.msra.mxu0 0.0
  %628 = vmatprep.subr.mxu0 0.0
  %629 = vmatpush1.msra.mxu0 0.0
  %630 = vmatprep.subr.mxu0 0.0
  %631 = vmatpush1.msra.mxu0 0.0
  %632 = vmatprep.subr.mxu0 0.0
  %633 = vmatpush1.msra.mxu0 0.0
  %634 = vmatprep.subr.mxu0 0.0
  %635 = vmatpush1.msra.mxu0 0.0
  %636 = vmatprep.subr.mxu0 0.0
  %637 = vmatpush1.msra.mxu0 0.0
  %638 = vmatprep.subr.mxu0 0.0
  %639 = vmatpush1.msra.mxu0 0.0
  %640 = vmatprep.subr.mxu0 0.0
  %641 = vmatpush1.msra.mxu0 0.0
  %642 = vmatprep.subr.mxu0 0.0
  %643 = vmatpush1.msra.mxu0 0.0
  %644 = vmatprep.subr.mxu0 0.0
  %645 = vmatpush1.msra.mxu0 0.0
  %646 = vmatprep.subr.mxu0 0.0
  %647 = vmatpush1.msra.mxu0 0.0
  %648 = vmatprep.subr.mxu0 0.0
  %649 = vmatpush1.msra.mxu0 0.0
  %650 = vmatprep.subr.mxu0 0.0
  %651 = vmatpush1.msra.mxu0 0.0
  %652 = vmatprep.subr.mxu0 0.0
  %653 = vmatpush1.msra.mxu0 0.0
  %654 = vmatprep.subr.mxu0 0.0
  %655 = vmatpush1.msra.mxu0 0.0
  %656 = vmatprep.subr.mxu0 0.0
  %657 = vmatpush1.msra.mxu0 0.0
  %658 = vmatprep.subr.mxu0 0.0
  %659 = vmatpush1.msra.mxu0 0.0
  %660 = vmatprep.subr.mxu0 0.0
  %661 = vmatpush1.msra.mxu0 0.0
  %662 = vmatprep.subr.mxu0 0.0
  %663 = vmatpush1.msra.mxu0 0.0
  %664 = vmatprep.subr.mxu0 0.0
  %665 = vmatpush1.msra.mxu0 0.0
  %666 = vmatprep.subr.mxu0 0.0
  %667 = vmatpush1.msra.mxu0 0.0
  %668 = vmatprep.subr.mxu0 0.0
  %669 = vmatpush1.msra.mxu0 0.0
  %670 = vmatprep.subr.mxu0 0.0
  %671 = vmatpush1.msra.mxu0 0.0
  %672 = vmatprep.mubr.f32.mxu0 0.0
  %673 = vmatmul.mubr.f32.gmra.mrb[0].mxu0 %v606
  %v674 = vpop.f32.mrb[0].mxu0
  %v675 = vadd.f32 0.0, %v674
  %v676 = vpop.f32.mrb[0].mxu0
  %677 = vdwg.mxu0
  %v678 = vadd.f32 %v605, %v675
  %v679 = vxor.u32 %v678, 2147483648
  %v680 = vmul.f32 %v679, 1.442695
  %v681 = vpow.pop %v680
  %v682 = vadd.f32 %v681, 1.0
  %v683 = vrcp.pop %v682
  %v684 = vmul.f32 1.0, %v683
  %v685 = vtanh.pop %v678
  %v686 = vmul.f32 %v684, %v593
  %688 = vrot.lane.b32.xlu0 %v685, 64
  %v689 = vpop.permute.xlu0 %688
  %v691 = vmul.f32 %v684, %v689
  %693 = vrot.lane.b32.xlu0 %v691, 32
  %v694 = vpop.permute.xlu0 %693
  %v696 = vadd.f32 %v686, %v694
  %v697 = vtanh.pop %v696
  %699 = vrot.lane.b32.xlu0 %v697, 64
  %v700 = vpop.permute.xlu0 %699
  %v702 = vmul.f32 %v684, %v700
  %704 = vrot.lane.b32.xlu0 %v702, 32
  %v705 = vpop.permute.xlu0 %704
  %707 = vst.msk [vmem:[#allocation2 + $0x20] sm:$0xff] %vm192, %v705
  %v708 = vld [vmem:[#allocation3 + $0x28] sm:$0xff]
  %v709 = vsel %vm192, %v705, 0
  %711 = vmatprep.subr.mxu0 0.0
  %712 = vmatpush1.msra.mxu0 %v34
  %713 = vmatprep.subr.mxu0 0.0
  %714 = vmatpush1.msra.mxu0 %v35
  %715 = vmatprep.subr.mxu0 0.0
  %716 = vmatpush1.msra.mxu0 %v36
  %717 = vmatprep.subr.mxu0 0.0
  %718 = vmatpush1.msra.mxu0 %v37
  %719 = vmatprep.subr.mxu0 0.0
  %720 = vmatpush1.msra.mxu0 0.0
  %721 = vmatprep.subr.mxu0 0.0
  %722 = vmatpush1.msra.mxu0 0.0
  %723 = vmatprep.subr.mxu0 0.0
  %724 = vmatpush1.msra.mxu0 0.0
  %725 = vmatprep.subr.mxu0 0.0
  %726 = vmatpush1.msra.mxu0 0.0
  %727 = vmatprep.subr.mxu0 0.0
  %728 = vmatpush1.msra.mxu0 0.0
  %729 = vmatprep.subr.mxu0 0.0
  %730 = vmatpush1.msra.mxu0 0.0
  %731 = vmatprep.subr.mxu0 0.0
  %732 = vmatpush1.msra.mxu0 0.0
  %733 = vmatprep.subr.mxu0 0.0
  %734 = vmatpush1.msra.mxu0 0.0
  %735 = vmatprep.subr.mxu0 0.0
  %736 = vmatpush1.msra.mxu0 0.0
  %737 = vmatprep.subr.mxu0 0.0
  %738 = vmatpush1.msra.mxu0 0.0
  %739 = vmatprep.subr.mxu0 0.0
  %740 = vmatpush1.msra.mxu0 0.0
  %741 = vmatprep.subr.mxu0 0.0
  %742 = vmatpush1.msra.mxu0 0.0
  %743 = vmatprep.subr.mxu0 0.0
  %744 = vmatpush1.msra.mxu0 0.0
  %745 = vmatprep.subr.mxu0 0.0
  %746 = vmatpush1.msra.mxu0 0.0
  %747 = vmatprep.subr.mxu0 0.0
  %748 = vmatpush1.msra.mxu0 0.0
  %749 = vmatprep.subr.mxu0 0.0
  %750 = vmatpush1.msra.mxu0 0.0
  %751 = vmatprep.subr.mxu0 0.0
  %752 = vmatpush1.msra.mxu0 0.0
  %753 = vmatprep.subr.mxu0 0.0
  %754 = vmatpush1.msra.mxu0 0.0
  %755 = vmatprep.subr.mxu0 0.0
  %756 = vmatpush1.msra.mxu0 0.0
  %757 = vmatprep.subr.mxu0 0.0
  %758 = vmatpush1.msra.mxu0 0.0
  %759 = vmatprep.subr.mxu0 0.0
  %760 = vmatpush1.msra.mxu0 0.0
  %761 = vmatprep.subr.mxu0 0.0
  %762 = vmatpush1.msra.mxu0 0.0
  %763 = vmatprep.subr.mxu0 0.0
  %764 = vmatpush1.msra.mxu0 0.0
  %765 = vmatprep.subr.mxu0 0.0
  %766 = vmatpush1.msra.mxu0 0.0
  %767 = vmatprep.subr.mxu0 0.0
  %768 = vmatpush1.msra.mxu0 0.0
  %769 = vmatprep.subr.mxu0 0.0
  %770 = vmatpush1.msra.mxu0 0.0
  %771 = vmatprep.subr.mxu0 0.0
  %772 = vmatpush1.msra.mxu0 0.0
  %773 = vmatprep.subr.mxu0 0.0
  %774 = vmatpush1.msra.mxu0 0.0
  %775 = vmatprep.mubr.f32.mxu0 0.0
  %776 = vmatmul.mubr.f32.gmra.mrb[0].mxu0 %v709
  %v777 = vpop.f32.mrb[0].mxu0
  %v778 = vadd.f32 0.0, %v777
  %v779 = vpop.f32.mrb[0].mxu0
  %780 = vdwg.mxu0
  %v781 = vadd.f32 %v708, %v778
  %v782 = vxor.u32 %v781, 2147483648
  %v783 = vmul.f32 %v782, 1.442695
  %v784 = vpow.pop %v783
  %v785 = vadd.f32 %v784, 1.0
  %v786 = vrcp.pop %v785
  %v787 = vmul.f32 1.0, %v786
  %v788 = vtanh.pop %v781
  %v789 = vmul.f32 %v787, %v696
  %791 = vrot.lane.b32.xlu0 %v788, 64
  %v792 = vpop.permute.xlu0 %791
  %v794 = vmul.f32 %v787, %v792
  %796 = vrot.lane.b32.xlu0 %v794, 32
  %v797 = vpop.permute.xlu0 %796
  %v799 = vadd.f32 %v789, %v797
  %v800 = vtanh.pop %v799
  %802 = vrot.lane.b32.xlu0 %v800, 64
  %v803 = vpop.permute.xlu0 %802
  %v805 = vmul.f32 %v787, %v803
  %807 = vrot.lane.b32.xlu0 %v805, 32
  %v808 = vpop.permute.xlu0 %807
  %810 = vst.msk [vmem:[#allocation2 + $0x28] sm:$0xff] %vm192, %v808
  %v811 = vld [vmem:[#allocation3 + $0x30] sm:$0xff]
  %v812 = vsel %vm192, %v808, 0
  %814 = vmatprep.subr.mxu0 0.0
  %815 = vmatpush1.msra.mxu0 %v34
  %816 = vmatprep.subr.mxu0 0.0
  %817 = vmatpush1.msra.mxu0 %v35
  %818 = vmatprep.subr.mxu0 0.0
  %819 = vmatpush1.msra.mxu0 %v36
  %820 = vmatprep.subr.mxu0 0.0
  %821 = vmatpush1.msra.mxu0 %v37
  %822 = vmatprep.subr.mxu0 0.0
  %823 = vmatpush1.msra.mxu0 0.0
  %824 = vmatprep.subr.mxu0 0.0
  %825 = vmatpush1.msra.mxu0 0.0
  %826 = vmatprep.subr.mxu0 0.0
  %827 = vmatpush1.msra.mxu0 0.0
  %828 = vmatprep.subr.mxu0 0.0
  %829 = vmatpush1.msra.mxu0 0.0
  %830 = vmatprep.subr.mxu0 0.0
  %831 = vmatpush1.msra.mxu0 0.0
  %832 = vmatprep.subr.mxu0 0.0
  %833 = vmatpush1.msra.mxu0 0.0
  %834 = vmatprep.subr.mxu0 0.0
  %835 = vmatpush1.msra.mxu0 0.0
  %836 = vmatprep.subr.mxu0 0.0
  %837 = vmatpush1.msra.mxu0 0.0
  %838 = vmatprep.subr.mxu0 0.0
  %839 = vmatpush1.msra.mxu0 0.0
  %840 = vmatprep.subr.mxu0 0.0
  %841 = vmatpush1.msra.mxu0 0.0
  %842 = vmatprep.subr.mxu0 0.0
  %843 = vmatpush1.msra.mxu0 0.0
  %844 = vmatprep.subr.mxu0 0.0
  %845 = vmatpush1.msra.mxu0 0.0
  %846 = vmatprep.subr.mxu0 0.0
  %847 = vmatpush1.msra.mxu0 0.0
  %848 = vmatprep.subr.mxu0 0.0
  %849 = vmatpush1.msra.mxu0 0.0
  %850 = vmatprep.subr.mxu0 0.0
  %851 = vmatpush1.msra.mxu0 0.0
  %852 = vmatprep.subr.mxu0 0.0
  %853 = vmatpush1.msra.mxu0 0.0
  %854 = vmatprep.subr.mxu0 0.0
  %855 = vmatpush1.msra.mxu0 0.0
  %856 = vmatprep.subr.mxu0 0.0
  %857 = vmatpush1.msra.mxu0 0.0
  %858 = vmatprep.subr.mxu0 0.0
  %859 = vmatpush1.msra.mxu0 0.0
  %860 = vmatprep.subr.mxu0 0.0
  %861 = vmatpush1.msra.mxu0 0.0
  %862 = vmatprep.subr.mxu0 0.0
  %863 = vmatpush1.msra.mxu0 0.0
  %864 = vmatprep.subr.mxu0 0.0
  %865 = vmatpush1.msra.mxu0 0.0
  %866 = vmatprep.subr.mxu0 0.0
  %867 = vmatpush1.msra.mxu0 0.0
  %868 = vmatprep.subr.mxu0 0.0
  %869 = vmatpush1.msra.mxu0 0.0
  %870 = vmatprep.subr.mxu0 0.0
  %871 = vmatpush1.msra.mxu0 0.0
  %872 = vmatprep.subr.mxu0 0.0
  %873 = vmatpush1.msra.mxu0 0.0
  %874 = vmatprep.subr.mxu0 0.0
  %875 = vmatpush1.msra.mxu0 0.0
  %876 = vmatprep.subr.mxu0 0.0
  %877 = vmatpush1.msra.mxu0 0.0
  %878 = vmatprep.mubr.f32.mxu0 0.0
  %879 = vmatmul.mubr.f32.gmra.mrb[0].mxu0 %v812
  %v880 = vpop.f32.mrb[0].mxu0
  %v881 = vadd.f32 0.0, %v880
  %v882 = vpop.f32.mrb[0].mxu0
  %883 = vdwg.mxu0
  %v884 = vadd.f32 %v811, %v881
  %v885 = vxor.u32 %v884, 2147483648
  %v886 = vmul.f32 %v885, 1.442695
  %v887 = vpow.pop %v886
  %v888 = vadd.f32 %v887, 1.0
  %v889 = vrcp.pop %v888
  %v890 = vmul.f32 1.0, %v889
  %v891 = vtanh.pop %v884
  %v892 = vmul.f32 %v890, %v799
  %894 = vrot.lane.b32.xlu0 %v891, 64
  %v895 = vpop.permute.xlu0 %894
  %v897 = vmul.f32 %v890, %v895
  %899 = vrot.lane.b32.xlu0 %v897, 32
  %v900 = vpop.permute.xlu0 %899
  %v902 = vadd.f32 %v892, %v900
  %v903 = vtanh.pop %v902
  %905 = vrot.lane.b32.xlu0 %v903, 64
  %v906 = vpop.permute.xlu0 %905
  %v908 = vmul.f32 %v890, %v906
  %910 = vrot.lane.b32.xlu0 %v908, 32
  %v911 = vpop.permute.xlu0 %910
  %913 = vst.msk [vmem:[#allocation2 + $0x30] sm:$0xff] %vm192, %v911
  %v914 = vld [vmem:[#allocation3 + $0x38] sm:$0xff]
  %v915 = vsel %vm192, %v911, 0
  %917 = vmatprep.subr.mxu0 0.0
  %918 = vmatpush1.msra.mxu0 %v34
  %919 = vmatprep.subr.mxu0 0.0
  %920 = vmatpush1.msra.mxu0 %v35
  %921 = vmatprep.subr.mxu0 0.0
  %922 = vmatpush1.msra.mxu0 %v36
  %923 = vmatprep.subr.mxu0 0.0
  %924 = vmatpush1.msra.mxu0 %v37
  %925 = vmatprep.subr.mxu0 0.0
  %926 = vmatpush1.msra.mxu0 0.0
  %927 = vmatprep.subr.mxu0 0.0
  %928 = vmatpush1.msra.mxu0 0.0
  %929 = vmatprep.subr.mxu0 0.0
  %930 = vmatpush1.msra.mxu0 0.0
  %931 = vmatprep.subr.mxu0 0.0
  %932 = vmatpush1.msra.mxu0 0.0
  %933 = vmatprep.subr.mxu0 0.0
  %934 = vmatpush1.msra.mxu0 0.0
  %935 = vmatprep.subr.mxu0 0.0
  %936 = vmatpush1.msra.mxu0 0.0
  %937 = vmatprep.subr.mxu0 0.0
  %938 = vmatpush1.msra.mxu0 0.0
  %939 = vmatprep.subr.mxu0 0.0
  %940 = vmatpush1.msra.mxu0 0.0
  %941 = vmatprep.subr.mxu0 0.0
  %942 = vmatpush1.msra.mxu0 0.0
  %943 = vmatprep.subr.mxu0 0.0
  %944 = vmatpush1.msra.mxu0 0.0
  %945 = vmatprep.subr.mxu0 0.0
  %946 = vmatpush1.msra.mxu0 0.0
  %947 = vmatprep.subr.mxu0 0.0
  %948 = vmatpush1.msra.mxu0 0.0
  %949 = vmatprep.subr.mxu0 0.0
  %950 = vmatpush1.msra.mxu0 0.0
  %951 = vmatprep.subr.mxu0 0.0
  %952 = vmatpush1.msra.mxu0 0.0
  %953 = vmatprep.subr.mxu0 0.0
  %954 = vmatpush1.msra.mxu0 0.0
  %955 = vmatprep.subr.mxu0 0.0
  %956 = vmatpush1.msra.mxu0 0.0
  %957 = vmatprep.subr.mxu0 0.0
  %958 = vmatpush1.msra.mxu0 0.0
  %959 = vmatprep.subr.mxu0 0.0
  %960 = vmatpush1.msra.mxu0 0.0
  %961 = vmatprep.subr.mxu0 0.0
  %962 = vmatpush1.msra.mxu0 0.0
  %963 = vmatprep.subr.mxu0 0.0
  %964 = vmatpush1.msra.mxu0 0.0
  %965 = vmatprep.subr.mxu0 0.0
  %966 = vmatpush1.msra.mxu0 0.0
  %967 = vmatprep.subr.mxu0 0.0
  %968 = vmatpush1.msra.mxu0 0.0
  %969 = vmatprep.subr.mxu0 0.0
  %970 = vmatpush1.msra.mxu0 0.0
  %971 = vmatprep.subr.mxu0 0.0
  %972 = vmatpush1.msra.mxu0 0.0
  %973 = vmatprep.subr.mxu0 0.0
  %974 = vmatpush1.msra.mxu0 0.0
  %975 = vmatprep.subr.mxu0 0.0
  %976 = vmatpush1.msra.mxu0 0.0
  %977 = vmatprep.subr.mxu0 0.0
  %978 = vmatpush1.msra.mxu0 0.0
  %979 = vmatprep.subr.mxu0 0.0
  %980 = vmatpush1.msra.mxu0 0.0
  %981 = vmatprep.mubr.f32.mxu0 0.0
  %982 = vmatmul.mubr.f32.gmra.mrb[0].mxu0 %v915
  %v983 = vpop.f32.mrb[0].mxu0
  %v984 = vadd.f32 0.0, %v983
  %v985 = vpop.f32.mrb[0].mxu0
  %986 = vdwg.mxu0
  %v987 = vadd.f32 %v914, %v984
  %v988 = vxor.u32 %v987, 2147483648
  %v989 = vmul.f32 %v988, 1.442695
  %v990 = vpow.pop %v989
  %v991 = vadd.f32 %v990, 1.0
  %v992 = vrcp.pop %v991
  %v993 = vmul.f32 1.0, %v992
  %v994 = vtanh.pop %v987
  %v995 = vmul.f32 %v993, %v902
  %997 = vrot.lane.b32.xlu0 %v994, 64
  %v998 = vpop.permute.xlu0 %997
  %v1000 = vmul.f32 %v993, %v998
  %1002 = vrot.lane.b32.xlu0 %v1000, 32
  %v1003 = vpop.permute.xlu0 %1002
  %v1005 = vadd.f32 %v995, %v1003
  %v1006 = vtanh.pop %v1005
  %1008 = vrot.lane.b32.xlu0 %v1006, 64
  %v1009 = vpop.permute.xlu0 %1008
  %v1011 = vmul.f32 %v993, %v1009
  %1013 = vrot.lane.b32.xlu0 %v1011, 32
  %v1014 = vpop.permute.xlu0 %1013
  %1016 = vst.msk [vmem:[#allocation2 + $0x38] sm:$0xff] %vm192, %v1014
  %v1017 = vld [vmem:[%s4] sm:$0xff]
  %v1018 = vld [vmem:[%s4 + $0x8] sm:$0xff]
  %v1019 = vld [vmem:[%s4 + $0x10] sm:$0xff]
  %v1020 = vld [vmem:[%s4 + $0x18] sm:$0xff]
  %v1021 = vld [vmem:[%s5] sm:$0xff]
  %v1022 = vld [vmem:[%s5 + $0x8] sm:$0xff]
  %v1023 = vld [vmem:[%s5 + $0x10] sm:$0xff]
  %v1024 = vld [vmem:[%s5 + $0x18] sm:$0xff]
  %v1025 = vld [vmem:[%s6] sm:$0x1]
  %v1026 = vld [vmem:[#allocation2] sm:$0xff]
  %v1027 = vld [vmem:[#allocation2 + $0x8] sm:$0xff]
  %v1028 = vld [vmem:[#allocation2 + $0x10] sm:$0xff]
  %v1029 = vld [vmem:[#allocation2 + $0x18] sm:$0xff]
  %v1030 = vld [vmem:[#allocation2 + $0x20] sm:$0xff]
  %v1031 = vld [vmem:[#allocation2 + $0x28] sm:$0xff]
  %v1032 = vld [vmem:[#allocation2 + $0x30] sm:$0xff]
  %v1033 = vld [vmem:[#allocation2 + $0x38] sm:$0xff]
  %v1035 = vlaneseq
  %v1036 = vshrl.u32 %v1035, 7
  %v1037 = vsub.s32 0, %v1036
  %v1038 = vrot.slane %v1025, %v1037
  %v1041 = vsel %vm192, %v1026, 0
  %v1044 = vsel %vm192, %v1027, 0
  %v1047 = vsel %vm192, %v1028, 0
  %v1050 = vsel %vm192, %v1029, 0
  %v1053 = vsel %vm192, %v1030, 0
  %v1056 = vsel %vm192, %v1031, 0
  %v1059 = vsel %vm192, %v1032, 0
  %v1062 = vsel %vm192, %v1033, 0
  %1064 = vmatprep.subr.mxu0 0.0
  %1065 = vmatpush1.msra.mxu0 %v1017
  %1066 = vmatprep.subr.mxu0 0.0
  %1067 = vmatpush1.msra.mxu0 %v1018
  %1068 = vmatprep.subr.mxu0 0.0
  %1069 = vmatpush1.msra.mxu0 %v1019
  %1070 = vmatprep.subr.mxu0 0.0
  %1071 = vmatpush1.msra.mxu0 %v1020
  %1072 = vmatprep.subr.mxu0 0.0
  %1073 = vmatpush1.msra.mxu0 0.0
  %1074 = vmatprep.subr.mxu0 0.0
  %1075 = vmatpush1.msra.mxu0 0.0
  %1076 = vmatprep.subr.mxu0 0.0
  %1077 = vmatpush1.msra.mxu0 0.0
  %1078 = vmatprep.subr.mxu0 0.0
  %1079 = vmatpush1.msra.mxu0 0.0
  %1080 = vmatprep.subr.mxu0 0.0
  %1081 = vmatpush1.msra.mxu0 0.0
  %1082 = vmatprep.subr.mxu0 0.0
  %1083 = vmatpush1.msra.mxu0 0.0
  %1084 = vmatprep.subr.mxu0 0.0
  %1085 = vmatpush1.msra.mxu0 0.0
  %1086 = vmatprep.subr.mxu0 0.0
  %1087 = vmatpush1.msra.mxu0 0.0
  %1088 = vmatprep.subr.mxu0 0.0
  %1089 = vmatpush1.msra.mxu0 0.0
  %1090 = vmatprep.subr.mxu0 0.0
  %1091 = vmatpush1.msra.mxu0 0.0
  %1092 = vmatprep.subr.mxu0 0.0
  %1093 = vmatpush1.msra.mxu0 0.0
  %1094 = vmatprep.subr.mxu0 0.0
  %1095 = vmatpush1.msra.mxu0 0.0
  %1096 = vmatprep.subr.mxu0 0.0
  %1097 = vmatpush1.msra.mxu0 0.0
  %1098 = vmatprep.subr.mxu0 0.0
  %1099 = vmatpush1.msra.mxu0 0.0
  %1100 = vmatprep.subr.mxu0 0.0
  %1101 = vmatpush1.msra.mxu0 0.0
  %1102 = vmatprep.subr.mxu0 0.0
  %1103 = vmatpush1.msra.mxu0 0.0
  %1104 = vmatprep.subr.mxu0 0.0
  %1105 = vmatpush1.msra.mxu0 0.0
  %1106 = vmatprep.subr.mxu0 0.0
  %1107 = vmatpush1.msra.mxu0 0.0
  %1108 = vmatprep.subr.mxu0 0.0
  %1109 = vmatpush1.msra.mxu0 0.0
  %1110 = vmatprep.subr.mxu0 0.0
  %1111 = vmatpush1.msra.mxu0 0.0
  %1112 = vmatprep.subr.mxu0 0.0
  %1113 = vmatpush1.msra.mxu0 0.0
  %1114 = vmatprep.subr.mxu0 0.0
  %1115 = vmatpush1.msra.mxu0 0.0
  %1116 = vmatprep.subr.mxu0 0.0
  %1117 = vmatpush1.msra.mxu0 0.0
  %1118 = vmatprep.subr.mxu0 0.0
  %1119 = vmatpush1.msra.mxu0 0.0
  %1120 = vmatprep.subr.mxu0 0.0
  %1121 = vmatpush1.msra.mxu0 0.0
  %1122 = vmatprep.subr.mxu0 0.0
  %1123 = vmatpush1.msra.mxu0 0.0
  %1124 = vmatprep.subr.mxu0 0.0
  %1125 = vmatpush1.msra.mxu0 0.0
  %1126 = vmatprep.subr.mxu0 0.0
  %1127 = vmatpush1.msra.mxu0 0.0
  %1128 = vmatprep.mubr.f32.mxu0 0.0
  %1129 = vmatmul.mubr.f32.gmra.mrb[0].mxu0 %v1041
  %v1130 = vpop.f32.mrb[0].mxu0
  %v1131 = vadd.f32 %v1038, %v1130
  %v1132 = vpop.f32.mrb[0].mxu0
  %1133 = vmatprep.mubr.f32.mxu0 0.0
  %1134 = vmatmul.mubr.f32.gmra.mrb[0].mxu0 %v1044
  %v1135 = vpop.f32.mrb[0].mxu0
  %v1136 = vadd.f32 %v1038, %v1135
  %v1137 = vpop.f32.mrb[0].mxu0
  %1138 = vmatprep.mubr.f32.mxu0 0.0
  %1139 = vmatmul.mubr.f32.gmra.mrb[0].mxu0 %v1047
  %v1140 = vpop.f32.mrb[0].mxu0
  %v1141 = vadd.f32 %v1038, %v1140
  %v1142 = vpop.f32.mrb[0].mxu0
  %1143 = vmatprep.mubr.f32.mxu0 0.0
  %1144 = vmatmul.mubr.f32.gmra.mrb[0].mxu0 %v1050
  %v1145 = vpop.f32.mrb[0].mxu0
  %v1146 = vadd.f32 %v1038, %v1145
  %v1147 = vpop.f32.mrb[0].mxu0
  %1148 = vmatprep.mubr.f32.mxu0 0.0
  %1149 = vmatmul.mubr.f32.gmra.mrb[0].mxu0 %v1053
  %v1150 = vpop.f32.mrb[0].mxu0
  %v1151 = vadd.f32 %v1038, %v1150
  %v1152 = vpop.f32.mrb[0].mxu0
  %1153 = vmatprep.mubr.f32.mxu0 0.0
  %1154 = vmatmul.mubr.f32.gmra.mrb[0].mxu0 %v1056
  %v1155 = vpop.f32.mrb[0].mxu0
  %v1156 = vadd.f32 %v1038, %v1155
  %v1157 = vpop.f32.mrb[0].mxu0
  %1158 = vmatprep.mubr.f32.mxu0 0.0
  %1159 = vmatmul.mubr.f32.gmra.mrb[0].mxu0 %v1059
  %v1160 = vpop.f32.mrb[0].mxu0
  %v1161 = vadd.f32 %v1038, %v1160
  %v1162 = vpop.f32.mrb[0].mxu0
  %1163 = vmatprep.mubr.f32.mxu0 0.0
  %1164 = vmatmul.mubr.f32.gmra.mrb[0].mxu0 %v1062
  %v1165 = vpop.f32.mrb[0].mxu0
  %v1166 = vadd.f32 %v1038, %v1165
  %v1167 = vpop.f32.mrb[0].mxu0
  %1168 = vdwg.mxu0
  %1169 = vst [vmem:[#allocation3] sm:$0xff] %v1131
  %1170 = vst [vmem:[#allocation3 + $0x8] sm:$0xff] %v1136
  %1171 = vst [vmem:[#allocation3 + $0x10] sm:$0xff] %v1141
  %1172 = vst [vmem:[#allocation3 + $0x18] sm:$0xff] %v1146
  %1173 = vst [vmem:[#allocation3 + $0x20] sm:$0xff] %v1151
  %1174 = vst [vmem:[#allocation3 + $0x28] sm:$0xff] %v1156
  %1175 = vst [vmem:[#allocation3 + $0x30] sm:$0xff] %v1161
  %1176 = vst [vmem:[#allocation3 + $0x38] sm:$0xff] %v1166
  %v1177 = vld [vmem:[#allocation3] sm:$0xff]
  %1178 = vmatprep.subr.mxu0 0.0
  %1179 = vmatpush1.msra.mxu0 %v1021
  %1180 = vmatprep.subr.mxu0 0.0
  %1181 = vmatpush1.msra.mxu0 %v1022
  %1182 = vmatprep.subr.mxu0 0.0
  %1183 = vmatpush1.msra.mxu0 %v1023
  %1184 = vmatprep.subr.mxu0 0.0
  %1185 = vmatpush1.msra.mxu0 %v1024
  %1186 = vmatprep.subr.mxu0 0.0
  %1187 = vmatpush1.msra.mxu0 0.0
  %1188 = vmatprep.subr.mxu0 0.0
  %1189 = vmatpush1.msra.mxu0 0.0
  %1190 = vmatprep.subr.mxu0 0.0
  %1191 = vmatpush1.msra.mxu0 0.0
  %1192 = vmatprep.subr.mxu0 0.0
  %1193 = vmatpush1.msra.mxu0 0.0
  %1194 = vmatprep.subr.mxu0 0.0
  %1195 = vmatpush1.msra.mxu0 0.0
  %1196 = vmatprep.subr.mxu0 0.0
  %1197 = vmatpush1.msra.mxu0 0.0
  %1198 = vmatprep.subr.mxu0 0.0
  %1199 = vmatpush1.msra.mxu0 0.0
  %1200 = vmatprep.subr.mxu0 0.0
  %1201 = vmatpush1.msra.mxu0 0.0
  %1202 = vmatprep.subr.mxu0 0.0
  %1203 = vmatpush1.msra.mxu0 0.0
  %1204 = vmatprep.subr.mxu0 0.0
  %1205 = vmatpush1.msra.mxu0 0.0
  %1206 = vmatprep.subr.mxu0 0.0
  %1207 = vmatpush1.msra.mxu0 0.0
  %1208 = vmatprep.subr.mxu0 0.0
  %1209 = vmatpush1.msra.mxu0 0.0
  %1210 = vmatprep.subr.mxu0 0.0
  %1211 = vmatpush1.msra.mxu0 0.0
  %1212 = vmatprep.subr.mxu0 0.0
  %1213 = vmatpush1.msra.mxu0 0.0
  %1214 = vmatprep.subr.mxu0 0.0
  %1215 = vmatpush1.msra.mxu0 0.0
  %1216 = vmatprep.subr.mxu0 0.0
  %1217 = vmatpush1.msra.mxu0 0.0
  %1218 = vmatprep.subr.mxu0 0.0
  %1219 = vmatpush1.msra.mxu0 0.0
  %1220 = vmatprep.subr.mxu0 0.0
  %1221 = vmatpush1.msra.mxu0 0.0
  %1222 = vmatprep.subr.mxu0 0.0
  %1223 = vmatpush1.msra.mxu0 0.0
  %1224 = vmatprep.subr.mxu0 0.0
  %1225 = vmatpush1.msra.mxu0 0.0
  %1226 = vmatprep.subr.mxu0 0.0
  %1227 = vmatpush1.msra.mxu0 0.0
  %1228 = vmatprep.subr.mxu0 0.0
  %1229 = vmatpush1.msra.mxu0 0.0
  %1230 = vmatprep.subr.mxu0 0.0
  %1231 = vmatpush1.msra.mxu0 0.0
  %1232 = vmatprep.subr.mxu0 0.0
  %1233 = vmatpush1.msra.mxu0 0.0
  %1234 = vmatprep.subr.mxu0 0.0
  %1235 = vmatpush1.msra.mxu0 0.0
  %1236 = vmatprep.subr.mxu0 0.0
  %1237 = vmatpush1.msra.mxu0 0.0
  %1238 = vmatprep.subr.mxu0 0.0
  %1239 = vmatpush1.msra.mxu0 0.0
  %1240 = vmatprep.subr.mxu0 0.0
  %1241 = vmatpush1.msra.mxu0 0.0
  %1242 = vmatprep.mubr.f32.mxu0 0.0
  %1243 = vmatmul.mubr.f32.gmra.mrb[0].mxu0 %v194
  %v1244 = vpop.f32.mrb[0].mxu0
  %v1245 = vadd.f32 0.0, %v1244
  %v1246 = vpop.f32.mrb[0].mxu0
  %1247 = vdwg.mxu0
  %v1248 = vadd.f32 %v1177, %v1245
  %v1249 = vxor.u32 %v1248, 2147483648
  %v1250 = vmul.f32 %v1249, 1.442695
  %v1251 = vpow.pop %v1250
  %v1252 = vadd.f32 %v1251, 1.0
  %v1253 = vrcp.pop %v1252
  %v1254 = vmul.f32 1.0, %v1253
  %v1255 = vtanh.pop %v1248
  %v1256 = vmul.f32 %v1254, 0.0
  %1258 = vrot.lane.b32.xlu0 %v1255, 64
  %v1259 = vpop.permute.xlu0 %1258
  %v1261 = vmul.f32 %v1254, %v1259
  %1263 = vrot.lane.b32.xlu0 %v1261, 32
  %v1264 = vpop.permute.xlu0 %1263
  %v1266 = vadd.f32 %v1256, %v1264
  %v1267 = vtanh.pop %v1266
  %1269 = vrot.lane.b32.xlu0 %v1267, 64
  %v1270 = vpop.permute.xlu0 %1269
  %v1272 = vmul.f32 %v1254, %v1270
  %v1273 = vld [vmem:[#allocation3 + $0x8] sm:$0xff]
  %1275 = vrot.lane.b32.xlu0 %v1272, 32
  %v1276 = vpop.permute.xlu0 %1275
  %v1277 = vsel %vm192, %v1276, 0
  %1279 = vmatprep.subr.mxu0 0.0
  %1280 = vmatpush1.msra.mxu0 %v1021
  %1281 = vmatprep.subr.mxu0 0.0
  %1282 = vmatpush1.msra.mxu0 %v1022
  %1283 = vmatprep.subr.mxu0 0.0
  %1284 = vmatpush1.msra.mxu0 %v1023
  %1285 = vmatprep.subr.mxu0 0.0
  %1286 = vmatpush1.msra.mxu0 %v1024
  %1287 = vmatprep.subr.mxu0 0.0
  %1288 = vmatpush1.msra.mxu0 0.0
  %1289 = vmatprep.subr.mxu0 0.0
  %1290 = vmatpush1.msra.mxu0 0.0
  %1291 = vmatprep.subr.mxu0 0.0
  %1292 = vmatpush1.msra.mxu0 0.0
  %1293 = vmatprep.subr.mxu0 0.0
  %1294 = vmatpush1.msra.mxu0 0.0
  %1295 = vmatprep.subr.mxu0 0.0
  %1296 = vmatpush1.msra.mxu0 0.0
  %1297 = vmatprep.subr.mxu0 0.0
  %1298 = vmatpush1.msra.mxu0 0.0
  %1299 = vmatprep.subr.mxu0 0.0
  %1300 = vmatpush1.msra.mxu0 0.0
  %1301 = vmatprep.subr.mxu0 0.0
  %1302 = vmatpush1.msra.mxu0 0.0
  %1303 = vmatprep.subr.mxu0 0.0
  %1304 = vmatpush1.msra.mxu0 0.0
  %1305 = vmatprep.subr.mxu0 0.0
  %1306 = vmatpush1.msra.mxu0 0.0
  %1307 = vmatprep.subr.mxu0 0.0
  %1308 = vmatpush1.msra.mxu0 0.0
  %1309 = vmatprep.subr.mxu0 0.0
  %1310 = vmatpush1.msra.mxu0 0.0
  %1311 = vmatprep.subr.mxu0 0.0
  %1312 = vmatpush1.msra.mxu0 0.0
  %1313 = vmatprep.subr.mxu0 0.0
  %1314 = vmatpush1.msra.mxu0 0.0
  %1315 = vmatprep.subr.mxu0 0.0
  %1316 = vmatpush1.msra.mxu0 0.0
  %1317 = vmatprep.subr.mxu0 0.0
  %1318 = vmatpush1.msra.mxu0 0.0
  %1319 = vmatprep.subr.mxu0 0.0
  %1320 = vmatpush1.msra.mxu0 0.0
  %1321 = vmatprep.subr.mxu0 0.0
  %1322 = vmatpush1.msra.mxu0 0.0
  %1323 = vmatprep.subr.mxu0 0.0
  %1324 = vmatpush1.msra.mxu0 0.0
  %1325 = vmatprep.subr.mxu0 0.0
  %1326 = vmatpush1.msra.mxu0 0.0
  %1327 = vmatprep.subr.mxu0 0.0
  %1328 = vmatpush1.msra.mxu0 0.0
  %1329 = vmatprep.subr.mxu0 0.0
  %1330 = vmatpush1.msra.mxu0 0.0
  %1331 = vmatprep.subr.mxu0 0.0
  %1332 = vmatpush1.msra.mxu0 0.0
  %1333 = vmatprep.subr.mxu0 0.0
  %1334 = vmatpush1.msra.mxu0 0.0
  %1335 = vmatprep.subr.mxu0 0.0
  %1336 = vmatpush1.msra.mxu0 0.0
  %1337 = vmatprep.subr.mxu0 0.0
  %1338 = vmatpush1.msra.mxu0 0.0
  %1339 = vmatprep.subr.mxu0 0.0
  %1340 = vmatpush1.msra.mxu0 0.0
  %1341 = vmatprep.subr.mxu0 0.0
  %1342 = vmatpush1.msra.mxu0 0.0
  %1343 = vmatprep.mubr.f32.mxu0 0.0
  %1344 = vmatmul.mubr.f32.gmra.mrb[0].mxu0 %v1277
  %v1345 = vpop.f32.mrb[0].mxu0
  %v1346 = vadd.f32 0.0, %v1345
  %v1347 = vpop.f32.mrb[0].mxu0
  %1348 = vdwg.mxu0
  %v1349 = vadd.f32 %v1273, %v1346
  %v1350 = vxor.u32 %v1349, 2147483648
  %v1351 = vmul.f32 %v1350, 1.442695
  %v1352 = vpow.pop %v1351
  %v1353 = vadd.f32 %v1352, 1.0
  %v1354 = vrcp.pop %v1353
  %v1355 = vmul.f32 1.0, %v1354
  %v1356 = vtanh.pop %v1349
  %v1357 = vmul.f32 %v1355, %v1266
  %1359 = vrot.lane.b32.xlu0 %v1356, 64
  %v1360 = vpop.permute.xlu0 %1359
  %v1362 = vmul.f32 %v1355, %v1360
  %1364 = vrot.lane.b32.xlu0 %v1362, 32
  %v1365 = vpop.permute.xlu0 %1364
  %v1367 = vadd.f32 %v1357, %v1365
  %v1368 = vtanh.pop %v1367
  %1370 = vrot.lane.b32.xlu0 %v1368, 64
  %v1371 = vpop.permute.xlu0 %1370
  %v1373 = vmul.f32 %v1355, %v1371
  %v1374 = vld [vmem:[#allocation3 + $0x10] sm:$0xff]
  %1376 = vrot.lane.b32.xlu0 %v1373, 32
  %v1377 = vpop.permute.xlu0 %1376
  %v1378 = vsel %vm192, %v1377, 0
  %1380 = vmatprep.subr.mxu0 0.0
  %1381 = vmatpush1.msra.mxu0 %v1021
  %1382 = vmatprep.subr.mxu0 0.0
  %1383 = vmatpush1.msra.mxu0 %v1022
  %1384 = vmatprep.subr.mxu0 0.0
  %1385 = vmatpush1.msra.mxu0 %v1023
  %1386 = vmatprep.subr.mxu0 0.0
  %1387 = vmatpush1.msra.mxu0 %v1024
  %1388 = vmatprep.subr.mxu0 0.0
  %1389 = vmatpush1.msra.mxu0 0.0
  %1390 = vmatprep.subr.mxu0 0.0
  %1391 = vmatpush1.msra.mxu0 0.0
  %1392 = vmatprep.subr.mxu0 0.0
  %1393 = vmatpush1.msra.mxu0 0.0
  %1394 = vmatprep.subr.mxu0 0.0
  %1395 = vmatpush1.msra.mxu0 0.0
  %1396 = vmatprep.subr.mxu0 0.0
  %1397 = vmatpush1.msra.mxu0 0.0
  %1398 = vmatprep.subr.mxu0 0.0
  %1399 = vmatpush1.msra.mxu0 0.0
  %1400 = vmatprep.subr.mxu0 0.0
  %1401 = vmatpush1.msra.mxu0 0.0
  %1402 = vmatprep.subr.mxu0 0.0
  %1403 = vmatpush1.msra.mxu0 0.0
  %1404 = vmatprep.subr.mxu0 0.0
  %1405 = vmatpush1.msra.mxu0 0.0
  %1406 = vmatprep.subr.mxu0 0.0
  %1407 = vmatpush1.msra.mxu0 0.0
  %1408 = vmatprep.subr.mxu0 0.0
  %1409 = vmatpush1.msra.mxu0 0.0
  %1410 = vmatprep.subr.mxu0 0.0
  %1411 = vmatpush1.msra.mxu0 0.0
  %1412 = vmatprep.subr.mxu0 0.0
  %1413 = vmatpush1.msra.mxu0 0.0
  %1414 = vmatprep.subr.mxu0 0.0
  %1415 = vmatpush1.msra.mxu0 0.0
  %1416 = vmatprep.subr.mxu0 0.0
  %1417 = vmatpush1.msra.mxu0 0.0
  %1418 = vmatprep.subr.mxu0 0.0
  %1419 = vmatpush1.msra.mxu0 0.0
  %1420 = vmatprep.subr.mxu0 0.0
  %1421 = vmatpush1.msra.mxu0 0.0
  %1422 = vmatprep.subr.mxu0 0.0
  %1423 = vmatpush1.msra.mxu0 0.0
  %1424 = vmatprep.subr.mxu0 0.0
  %1425 = vmatpush1.msra.mxu0 0.0
  %1426 = vmatprep.subr.mxu0 0.0
  %1427 = vmatpush1.msra.mxu0 0.0
  %1428 = vmatprep.subr.mxu0 0.0
  %1429 = vmatpush1.msra.mxu0 0.0
  %1430 = vmatprep.subr.mxu0 0.0
  %1431 = vmatpush1.msra.mxu0 0.0
  %1432 = vmatprep.subr.mxu0 0.0
  %1433 = vmatpush1.msra.mxu0 0.0
  %1434 = vmatprep.subr.mxu0 0.0
  %1435 = vmatpush1.msra.mxu0 0.0
  %1436 = vmatprep.subr.mxu0 0.0
  %1437 = vmatpush1.msra.mxu0 0.0
  %1438 = vmatprep.subr.mxu0 0.0
  %1439 = vmatpush1.msra.mxu0 0.0
  %1440 = vmatprep.subr.mxu0 0.0
  %1441 = vmatpush1.msra.mxu0 0.0
  %1442 = vmatprep.subr.mxu0 0.0
  %1443 = vmatpush1.msra.mxu0 0.0
  %1444 = vmatprep.mubr.f32.mxu0 0.0
  %1445 = vmatmul.mubr.f32.gmra.mrb[0].mxu0 %v1378
  %v1446 = vpop.f32.mrb[0].mxu0
  %v1447 = vadd.f32 0.0, %v1446
  %v1448 = vpop.f32.mrb[0].mxu0
  %1449 = vdwg.mxu0
  %v1450 = vadd.f32 %v1374, %v1447
  %v1451 = vxor.u32 %v1450, 2147483648
  %v1452 = vmul.f32 %v1451, 1.442695
  %v1453 = vpow.pop %v1452
  %v1454 = vadd.f32 %v1453, 1.0
  %v1455 = vrcp.pop %v1454
  %v1456 = vmul.f32 1.0, %v1455
  %v1457 = vtanh.pop %v1450
  %v1458 = vmul.f32 %v1456, %v1367
  %1460 = vrot.lane.b32.xlu0 %v1457, 64
  %v1461 = vpop.permute.xlu0 %1460
  %v1463 = vmul.f32 %v1456, %v1461
  %1465 = vrot.lane.b32.xlu0 %v1463, 32
  %v1466 = vpop.permute.xlu0 %1465
  %v1468 = vadd.f32 %v1458, %v1466
  %v1469 = vtanh.pop %v1468
  %1471 = vrot.lane.b32.xlu0 %v1469, 64
  %v1472 = vpop.permute.xlu0 %1471
  %v1474 = vmul.f32 %v1456, %v1472
  %v1475 = vld [vmem:[#allocation3 + $0x18] sm:$0xff]
  %1477 = vrot.lane.b32.xlu0 %v1474, 32
  %v1478 = vpop.permute.xlu0 %1477
  %v1479 = vsel %vm192, %v1478, 0
  %1481 = vmatprep.subr.mxu0 0.0
  %1482 = vmatpush1.msra.mxu0 %v1021
  %1483 = vmatprep.subr.mxu0 0.0
  %1484 = vmatpush1.msra.mxu0 %v1022
  %1485 = vmatprep.subr.mxu0 0.0
  %1486 = vmatpush1.msra.mxu0 %v1023
  %1487 = vmatprep.subr.mxu0 0.0
  %1488 = vmatpush1.msra.mxu0 %v1024
  %1489 = vmatprep.subr.mxu0 0.0
  %1490 = vmatpush1.msra.mxu0 0.0
  %1491 = vmatprep.subr.mxu0 0.0
  %1492 = vmatpush1.msra.mxu0 0.0
  %1493 = vmatprep.subr.mxu0 0.0
  %1494 = vmatpush1.msra.mxu0 0.0
  %1495 = vmatprep.subr.mxu0 0.0
  %1496 = vmatpush1.msra.mxu0 0.0
  %1497 = vmatprep.subr.mxu0 0.0
  %1498 = vmatpush1.msra.mxu0 0.0
  %1499 = vmatprep.subr.mxu0 0.0
  %1500 = vmatpush1.msra.mxu0 0.0
  %1501 = vmatprep.subr.mxu0 0.0
  %1502 = vmatpush1.msra.mxu0 0.0
  %1503 = vmatprep.subr.mxu0 0.0
  %1504 = vmatpush1.msra.mxu0 0.0
  %1505 = vmatprep.subr.mxu0 0.0
  %1506 = vmatpush1.msra.mxu0 0.0
  %1507 = vmatprep.subr.mxu0 0.0
  %1508 = vmatpush1.msra.mxu0 0.0
  %1509 = vmatprep.subr.mxu0 0.0
  %1510 = vmatpush1.msra.mxu0 0.0
  %1511 = vmatprep.subr.mxu0 0.0
  %1512 = vmatpush1.msra.mxu0 0.0
  %1513 = vmatprep.subr.mxu0 0.0
  %1514 = vmatpush1.msra.mxu0 0.0
  %1515 = vmatprep.subr.mxu0 0.0
  %1516 = vmatpush1.msra.mxu0 0.0
  %1517 = vmatprep.subr.mxu0 0.0
  %1518 = vmatpush1.msra.mxu0 0.0
  %1519 = vmatprep.subr.mxu0 0.0
  %1520 = vmatpush1.msra.mxu0 0.0
  %1521 = vmatprep.subr.mxu0 0.0
  %1522 = vmatpush1.msra.mxu0 0.0
  %1523 = vmatprep.subr.mxu0 0.0
  %1524 = vmatpush1.msra.mxu0 0.0
  %1525 = vmatprep.subr.mxu0 0.0
  %1526 = vmatpush1.msra.mxu0 0.0
  %1527 = vmatprep.subr.mxu0 0.0
  %1528 = vmatpush1.msra.mxu0 0.0
  %1529 = vmatprep.subr.mxu0 0.0
  %1530 = vmatpush1.msra.mxu0 0.0
  %1531 = vmatprep.subr.mxu0 0.0
  %1532 = vmatpush1.msra.mxu0 0.0
  %1533 = vmatprep.subr.mxu0 0.0
  %1534 = vmatpush1.msra.mxu0 0.0
  %1535 = vmatprep.subr.mxu0 0.0
  %1536 = vmatpush1.msra.mxu0 0.0
  %1537 = vmatprep.subr.mxu0 0.0
  %1538 = vmatpush1.msra.mxu0 0.0
  %1539 = vmatprep.subr.mxu0 0.0
  %1540 = vmatpush1.msra.mxu0 0.0
  %1541 = vmatprep.subr.mxu0 0.0
  %1542 = vmatpush1.msra.mxu0 0.0
  %1543 = vmatprep.subr.mxu0 0.0
  %1544 = vmatpush1.msra.mxu0 0.0
  %1545 = vmatprep.mubr.f32.mxu0 0.0
  %1546 = vmatmul.mubr.f32.gmra.mrb[0].mxu0 %v1479
  %v1547 = vpop.f32.mrb[0].mxu0
  %v1548 = vadd.f32 0.0, %v1547
  %v1549 = vpop.f32.mrb[0].mxu0
  %1550 = vdwg.mxu0
  %v1551 = vadd.f32 %v1475, %v1548
  %v1552 = vxor.u32 %v1551, 2147483648
  %v1553 = vmul.f32 %v1552, 1.442695
  %v1554 = vpow.pop %v1553
  %v1555 = vadd.f32 %v1554, 1.0
  %v1556 = vrcp.pop %v1555
  %v1557 = vmul.f32 1.0, %v1556
  %v1558 = vtanh.pop %v1551
  %v1559 = vmul.f32 %v1557, %v1468
  %1561 = vrot.lane.b32.xlu0 %v1558, 64
  %v1562 = vpop.permute.xlu0 %1561
  %v1564 = vmul.f32 %v1557, %v1562
  %1566 = vrot.lane.b32.xlu0 %v1564, 32
  %v1567 = vpop.permute.xlu0 %1566
  %v1569 = vadd.f32 %v1559, %v1567
  %v1570 = vtanh.pop %v1569
  %1572 = vrot.lane.b32.xlu0 %v1570, 64
  %v1573 = vpop.permute.xlu0 %1572
  %v1575 = vmul.f32 %v1557, %v1573
  %v1576 = vld [vmem:[#allocation3 + $0x20] sm:$0xff]
  %1578 = vrot.lane.b32.xlu0 %v1575, 32
  %v1579 = vpop.permute.xlu0 %1578
  %v1580 = vsel %vm192, %v1579, 0
  %1582 = vmatprep.subr.mxu0 0.0
  %1583 = vmatpush1.msra.mxu0 %v1021
  %1584 = vmatprep.subr.mxu0 0.0
  %1585 = vmatpush1.msra.mxu0 %v1022
  %1586 = vmatprep.subr.mxu0 0.0
  %1587 = vmatpush1.msra.mxu0 %v1023
  %1588 = vmatprep.subr.mxu0 0.0
  %1589 = vmatpush1.msra.mxu0 %v1024
  %1590 = vmatprep.subr.mxu0 0.0
  %1591 = vmatpush1.msra.mxu0 0.0
  %1592 = vmatprep.subr.mxu0 0.0
  %1593 = vmatpush1.msra.mxu0 0.0
  %1594 = vmatprep.subr.mxu0 0.0
  %1595 = vmatpush1.msra.mxu0 0.0
  %1596 = vmatprep.subr.mxu0 0.0
  %1597 = vmatpush1.msra.mxu0 0.0
  %1598 = vmatprep.subr.mxu0 0.0
  %1599 = vmatpush1.msra.mxu0 0.0
  %1600 = vmatprep.subr.mxu0 0.0
  %1601 = vmatpush1.msra.mxu0 0.0
  %1602 = vmatprep.subr.mxu0 0.0
  %1603 = vmatpush1.msra.mxu0 0.0
  %1604 = vmatprep.subr.mxu0 0.0
  %1605 = vmatpush1.msra.mxu0 0.0
  %1606 = vmatprep.subr.mxu0 0.0
  %1607 = vmatpush1.msra.mxu0 0.0
  %1608 = vmatprep.subr.mxu0 0.0
  %1609 = vmatpush1.msra.mxu0 0.0
  %1610 = vmatprep.subr.mxu0 0.0
  %1611 = vmatpush1.msra.mxu0 0.0
  %1612 = vmatprep.subr.mxu0 0.0
  %1613 = vmatpush1.msra.mxu0 0.0
  %1614 = vmatprep.subr.mxu0 0.0
  %1615 = vmatpush1.msra.mxu0 0.0
  %1616 = vmatprep.subr.mxu0 0.0
  %1617 = vmatpush1.msra.mxu0 0.0
  %1618 = vmatprep.subr.mxu0 0.0
  %1619 = vmatpush1.msra.mxu0 0.0
  %1620 = vmatprep.subr.mxu0 0.0
  %1621 = vmatpush1.msra.mxu0 0.0
  %1622 = vmatprep.subr.mxu0 0.0
  %1623 = vmatpush1.msra.mxu0 0.0
  %1624 = vmatprep.subr.mxu0 0.0
  %1625 = vmatpush1.msra.mxu0 0.0
  %1626 = vmatprep.subr.mxu0 0.0
  %1627 = vmatpush1.msra.mxu0 0.0
  %1628 = vmatprep.subr.mxu0 0.0
  %1629 = vmatpush1.msra.mxu0 0.0
  %1630 = vmatprep.subr.mxu0 0.0
  %1631 = vmatpush1.msra.mxu0 0.0
  %1632 = vmatprep.subr.mxu0 0.0
  %1633 = vmatpush1.msra.mxu0 0.0
  %1634 = vmatprep.subr.mxu0 0.0
  %1635 = vmatpush1.msra.mxu0 0.0
  %1636 = vmatprep.subr.mxu0 0.0
  %1637 = vmatpush1.msra.mxu0 0.0
  %1638 = vmatprep.subr.mxu0 0.0
  %1639 = vmatpush1.msra.mxu0 0.0
  %1640 = vmatprep.subr.mxu0 0.0
  %1641 = vmatpush1.msra.mxu0 0.0
  %1642 = vmatprep.subr.mxu0 0.0
  %1643 = vmatpush1.msra.mxu0 0.0
  %1644 = vmatprep.subr.mxu0 0.0
  %1645 = vmatpush1.msra.mxu0 0.0
  %1646 = vmatprep.mubr.f32.mxu0 0.0
  %1647 = vmatmul.mubr.f32.gmra.mrb[0].mxu0 %v1580
  %v1648 = vpop.f32.mrb[0].mxu0
  %v1649 = vadd.f32 0.0, %v1648
  %v1650 = vpop.f32.mrb[0].mxu0
  %1651 = vdwg.mxu0
  %v1652 = vadd.f32 %v1576, %v1649
  %v1653 = vxor.u32 %v1652, 2147483648
  %v1654 = vmul.f32 %v1653, 1.442695
  %v1655 = vpow.pop %v1654
  %v1656 = vadd.f32 %v1655, 1.0
  %v1657 = vrcp.pop %v1656
  %v1658 = vmul.f32 1.0, %v1657
  %v1659 = vtanh.pop %v1652
  %v1660 = vmul.f32 %v1658, %v1569
  %1662 = vrot.lane.b32.xlu0 %v1659, 64
  %v1663 = vpop.permute.xlu0 %1662
  %v1665 = vmul.f32 %v1658, %v1663
  %1667 = vrot.lane.b32.xlu0 %v1665, 32
  %v1668 = vpop.permute.xlu0 %1667
  %v1670 = vadd.f32 %v1660, %v1668
  %v1671 = vtanh.pop %v1670
  %1673 = vrot.lane.b32.xlu0 %v1671, 64
  %v1674 = vpop.permute.xlu0 %1673
  %v1676 = vmul.f32 %v1658, %v1674
  %v1677 = vld [vmem:[#allocation3 + $0x28] sm:$0xff]
  %1679 = vrot.lane.b32.xlu0 %v1676, 32
  %v1680 = vpop.permute.xlu0 %1679
  %v1681 = vsel %vm192, %v1680, 0
  %1683 = vmatprep.subr.mxu0 0.0
  %1684 = vmatpush1.msra.mxu0 %v1021
  %1685 = vmatprep.subr.mxu0 0.0
  %1686 = vmatpush1.msra.mxu0 %v1022
  %1687 = vmatprep.subr.mxu0 0.0
  %1688 = vmatpush1.msra.mxu0 %v1023
  %1689 = vmatprep.subr.mxu0 0.0
  %1690 = vmatpush1.msra.mxu0 %v1024
  %1691 = vmatprep.subr.mxu0 0.0
  %1692 = vmatpush1.msra.mxu0 0.0
  %1693 = vmatprep.subr.mxu0 0.0
  %1694 = vmatpush1.msra.mxu0 0.0
  %1695 = vmatprep.subr.mxu0 0.0
  %1696 = vmatpush1.msra.mxu0 0.0
  %1697 = vmatprep.subr.mxu0 0.0
  %1698 = vmatpush1.msra.mxu0 0.0
  %1699 = vmatprep.subr.mxu0 0.0
  %1700 = vmatpush1.msra.mxu0 0.0
  %1701 = vmatprep.subr.mxu0 0.0
  %1702 = vmatpush1.msra.mxu0 0.0
  %1703 = vmatprep.subr.mxu0 0.0
  %1704 = vmatpush1.msra.mxu0 0.0
  %1705 = vmatprep.subr.mxu0 0.0
  %1706 = vmatpush1.msra.mxu0 0.0
  %1707 = vmatprep.subr.mxu0 0.0
  %1708 = vmatpush1.msra.mxu0 0.0
  %1709 = vmatprep.subr.mxu0 0.0
  %1710 = vmatpush1.msra.mxu0 0.0
  %1711 = vmatprep.subr.mxu0 0.0
  %1712 = vmatpush1.msra.mxu0 0.0
  %1713 = vmatprep.subr.mxu0 0.0
  %1714 = vmatpush1.msra.mxu0 0.0
  %1715 = vmatprep.subr.mxu0 0.0
  %1716 = vmatpush1.msra.mxu0 0.0
  %1717 = vmatprep.subr.mxu0 0.0
  %1718 = vmatpush1.msra.mxu0 0.0
  %1719 = vmatprep.subr.mxu0 0.0
  %1720 = vmatpush1.msra.mxu0 0.0
  %1721 = vmatprep.subr.mxu0 0.0
  %1722 = vmatpush1.msra.mxu0 0.0
  %1723 = vmatprep.subr.mxu0 0.0
  %1724 = vmatpush1.msra.mxu0 0.0
  %1725 = vmatprep.subr.mxu0 0.0
  %1726 = vmatpush1.msra.mxu0 0.0
  %1727 = vmatprep.subr.mxu0 0.0
  %1728 = vmatpush1.msra.mxu0 0.0
  %1729 = vmatprep.subr.mxu0 0.0
  %1730 = vmatpush1.msra.mxu0 0.0
  %1731 = vmatprep.subr.mxu0 0.0
  %1732 = vmatpush1.msra.mxu0 0.0
  %1733 = vmatprep.subr.mxu0 0.0
  %1734 = vmatpush1.msra.mxu0 0.0
  %1735 = vmatprep.subr.mxu0 0.0
  %1736 = vmatpush1.msra.mxu0 0.0
  %1737 = vmatprep.subr.mxu0 0.0
  %1738 = vmatpush1.msra.mxu0 0.0
  %1739 = vmatprep.subr.mxu0 0.0
  %1740 = vmatpush1.msra.mxu0 0.0
  %1741 = vmatprep.subr.mxu0 0.0
  %1742 = vmatpush1.msra.mxu0 0.0
  %1743 = vmatprep.subr.mxu0 0.0
  %1744 = vmatpush1.msra.mxu0 0.0
  %1745 = vmatprep.subr.mxu0 0.0
  %1746 = vmatpush1.msra.mxu0 0.0
  %1747 = vmatprep.mubr.f32.mxu0 0.0
  %1748 = vmatmul.mubr.f32.gmra.mrb[0].mxu0 %v1681
  %v1749 = vpop.f32.mrb[0].mxu0
  %v1750 = vadd.f32 0.0, %v1749
  %v1751 = vpop.f32.mrb[0].mxu0
  %1752 = vdwg.mxu0
  %v1753 = vadd.f32 %v1677, %v1750
  %v1754 = vxor.u32 %v1753, 2147483648
  %v1755 = vmul.f32 %v1754, 1.442695
  %v1756 = vpow.pop %v1755
  %v1757 = vadd.f32 %v1756, 1.0
  %v1758 = vrcp.pop %v1757
  %v1759 = vmul.f32 1.0, %v1758
  %v1760 = vtanh.pop %v1753
  %v1761 = vmul.f32 %v1759, %v1670
  %1763 = vrot.lane.b32.xlu0 %v1760, 64
  %v1764 = vpop.permute.xlu0 %1763
  %v1766 = vmul.f32 %v1759, %v1764
  %1768 = vrot.lane.b32.xlu0 %v1766, 32
  %v1769 = vpop.permute.xlu0 %1768
  %v1771 = vadd.f32 %v1761, %v1769
  %v1772 = vtanh.pop %v1771
  %1774 = vrot.lane.b32.xlu0 %v1772, 64
  %v1775 = vpop.permute.xlu0 %1774
  %v1777 = vmul.f32 %v1759, %v1775
  %v1778 = vld [vmem:[#allocation3 + $0x30] sm:$0xff]
  %1780 = vrot.lane.b32.xlu0 %v1777, 32
  %v1781 = vpop.permute.xlu0 %1780
  %v1782 = vsel %vm192, %v1781, 0
  %1784 = vmatprep.subr.mxu0 0.0
  %1785 = vmatpush1.msra.mxu0 %v1021
  %1786 = vmatprep.subr.mxu0 0.0
  %1787 = vmatpush1.msra.mxu0 %v1022
  %1788 = vmatprep.subr.mxu0 0.0
  %1789 = vmatpush1.msra.mxu0 %v1023
  %1790 = vmatprep.subr.mxu0 0.0
  %1791 = vmatpush1.msra.mxu0 %v1024
  %1792 = vmatprep.subr.mxu0 0.0
  %1793 = vmatpush1.msra.mxu0 0.0
  %1794 = vmatprep.subr.mxu0 0.0
  %1795 = vmatpush1.msra.mxu0 0.0
  %1796 = vmatprep.subr.mxu0 0.0
  %1797 = vmatpush1.msra.mxu0 0.0
  %1798 = vmatprep.subr.mxu0 0.0
  %1799 = vmatpush1.msra.mxu0 0.0
  %1800 = vmatprep.subr.mxu0 0.0
  %1801 = vmatpush1.msra.mxu0 0.0
  %1802 = vmatprep.subr.mxu0 0.0
  %1803 = vmatpush1.msra.mxu0 0.0
  %1804 = vmatprep.subr.mxu0 0.0
  %1805 = vmatpush1.msra.mxu0 0.0
  %1806 = vmatprep.subr.mxu0 0.0
  %1807 = vmatpush1.msra.mxu0 0.0
  %1808 = vmatprep.subr.mxu0 0.0
  %1809 = vmatpush1.msra.mxu0 0.0
  %1810 = vmatprep.subr.mxu0 0.0
  %1811 = vmatpush1.msra.mxu0 0.0
  %1812 = vmatprep.subr.mxu0 0.0
  %1813 = vmatpush1.msra.mxu0 0.0
  %1814 = vmatprep.subr.mxu0 0.0
  %1815 = vmatpush1.msra.mxu0 0.0
  %1816 = vmatprep.subr.mxu0 0.0
  %1817 = vmatpush1.msra.mxu0 0.0
  %1818 = vmatprep.subr.mxu0 0.0
  %1819 = vmatpush1.msra.mxu0 0.0
  %1820 = vmatprep.subr.mxu0 0.0
  %1821 = vmatpush1.msra.mxu0 0.0
  %1822 = vmatprep.subr.mxu0 0.0
  %1823 = vmatpush1.msra.mxu0 0.0
  %1824 = vmatprep.subr.mxu0 0.0
  %1825 = vmatpush1.msra.mxu0 0.0
  %1826 = vmatprep.subr.mxu0 0.0
  %1827 = vmatpush1.msra.mxu0 0.0
  %1828 = vmatprep.subr.mxu0 0.0
  %1829 = vmatpush1.msra.mxu0 0.0
  %1830 = vmatprep.subr.mxu0 0.0
  %1831 = vmatpush1.msra.mxu0 0.0
  %1832 = vmatprep.subr.mxu0 0.0
  %1833 = vmatpush1.msra.mxu0 0.0
  %1834 = vmatprep.subr.mxu0 0.0
  %1835 = vmatpush1.msra.mxu0 0.0
  %1836 = vmatprep.subr.mxu0 0.0
  %1837 = vmatpush1.msra.mxu0 0.0
  %1838 = vmatprep.subr.mxu0 0.0
  %1839 = vmatpush1.msra.mxu0 0.0
  %1840 = vmatprep.subr.mxu0 0.0
  %1841 = vmatpush1.msra.mxu0 0.0
  %1842 = vmatprep.subr.mxu0 0.0
  %1843 = vmatpush1.msra.mxu0 0.0
  %1844 = vmatprep.subr.mxu0 0.0
  %1845 = vmatpush1.msra.mxu0 0.0
  %1846 = vmatprep.subr.mxu0 0.0
  %1847 = vmatpush1.msra.mxu0 0.0
  %1848 = vmatprep.mubr.f32.mxu0 0.0
  %1849 = vmatmul.mubr.f32.gmra.mrb[0].mxu0 %v1782
  %v1850 = vpop.f32.mrb[0].mxu0
  %v1851 = vadd.f32 0.0, %v1850
  %v1852 = vpop.f32.mrb[0].mxu0
  %1853 = vdwg.mxu0
  %v1854 = vadd.f32 %v1778, %v1851
  %v1855 = vxor.u32 %v1854, 2147483648
  %v1856 = vmul.f32 %v1855, 1.442695
  %v1857 = vpow.pop %v1856
  %v1858 = vadd.f32 %v1857, 1.0
  %v1859 = vrcp.pop %v1858
  %v1860 = vmul.f32 1.0, %v1859
  %v1861 = vtanh.pop %v1854
  %v1862 = vmul.f32 %v1860, %v1771
  %1864 = vrot.lane.b32.xlu0 %v1861, 64
  %v1865 = vpop.permute.xlu0 %1864
  %v1867 = vmul.f32 %v1860, %v1865
  %1869 = vrot.lane.b32.xlu0 %v1867, 32
  %v1870 = vpop.permute.xlu0 %1869
  %v1872 = vadd.f32 %v1862, %v1870
  %v1873 = vtanh.pop %v1872
  %1875 = vrot.lane.b32.xlu0 %v1873, 64
  %v1876 = vpop.permute.xlu0 %1875
  %v1878 = vmul.f32 %v1860, %v1876
  %v1879 = vld [vmem:[#allocation3 + $0x38] sm:$0xff]
  %1881 = vrot.lane.b32.xlu0 %v1878, 32
  %v1882 = vpop.permute.xlu0 %1881
  %v1883 = vsel %vm192, %v1882, 0
  %1885 = vmatprep.subr.mxu0 0.0
  %1886 = vmatpush1.msra.mxu0 %v1021
  %1887 = vmatprep.subr.mxu0 0.0
  %1888 = vmatpush1.msra.mxu0 %v1022
  %1889 = vmatprep.subr.mxu0 0.0
  %1890 = vmatpush1.msra.mxu0 %v1023
  %1891 = vmatprep.subr.mxu0 0.0
  %1892 = vmatpush1.msra.mxu0 %v1024
  %1893 = vmatprep.subr.mxu0 0.0
  %1894 = vmatpush1.msra.mxu0 0.0
  %1895 = vmatprep.subr.mxu0 0.0
  %1896 = vmatpush1.msra.mxu0 0.0
  %1897 = vmatprep.subr.mxu0 0.0
  %1898 = vmatpush1.msra.mxu0 0.0
  %1899 = vmatprep.subr.mxu0 0.0
  %1900 = vmatpush1.msra.mxu0 0.0
  %1901 = vmatprep.subr.mxu0 0.0
  %1902 = vmatpush1.msra.mxu0 0.0
  %1903 = vmatprep.subr.mxu0 0.0
  %1904 = vmatpush1.msra.mxu0 0.0
  %1905 = vmatprep.subr.mxu0 0.0
  %1906 = vmatpush1.msra.mxu0 0.0
  %1907 = vmatprep.subr.mxu0 0.0
  %1908 = vmatpush1.msra.mxu0 0.0
  %1909 = vmatprep.subr.mxu0 0.0
  %1910 = vmatpush1.msra.mxu0 0.0
  %1911 = vmatprep.subr.mxu0 0.0
  %1912 = vmatpush1.msra.mxu0 0.0
  %1913 = vmatprep.subr.mxu0 0.0
  %1914 = vmatpush1.msra.mxu0 0.0
  %1915 = vmatprep.subr.mxu0 0.0
  %1916 = vmatpush1.msra.mxu0 0.0
  %1917 = vmatprep.subr.mxu0 0.0
  %1918 = vmatpush1.msra.mxu0 0.0
  %1919 = vmatprep.subr.mxu0 0.0
  %1920 = vmatpush1.msra.mxu0 0.0
  %1921 = vmatprep.subr.mxu0 0.0
  %1922 = vmatpush1.msra.mxu0 0.0
  %1923 = vmatprep.subr.mxu0 0.0
  %1924 = vmatpush1.msra.mxu0 0.0
  %1925 = vmatprep.subr.mxu0 0.0
  %1926 = vmatpush1.msra.mxu0 0.0
  %1927 = vmatprep.subr.mxu0 0.0
  %1928 = vmatpush1.msra.mxu0 0.0
  %1929 = vmatprep.subr.mxu0 0.0
  %1930 = vmatpush1.msra.mxu0 0.0
  %1931 = vmatprep.subr.mxu0 0.0
  %1932 = vmatpush1.msra.mxu0 0.0
  %1933 = vmatprep.subr.mxu0 0.0
  %1934 = vmatpush1.msra.mxu0 0.0
  %1935 = vmatprep.subr.mxu0 0.0
  %1936 = vmatpush1.msra.mxu0 0.0
  %1937 = vmatprep.subr.mxu0 0.0
  %1938 = vmatpush1.msra.mxu0 0.0
  %1939 = vmatprep.subr.mxu0 0.0
  %1940 = vmatpush1.msra.mxu0 0.0
  %1941 = vmatprep.subr.mxu0 0.0
  %1942 = vmatpush1.msra.mxu0 0.0
  %1943 = vmatprep.subr.mxu0 0.0
  %1944 = vmatpush1.msra.mxu0 0.0
  %1945 = vmatprep.subr.mxu0 0.0
  %1946 = vmatpush1.msra.mxu0 0.0
  %1947 = vmatprep.subr.mxu0 0.0
  %1948 = vmatpush1.msra.mxu0 0.0
  %1949 = vmatprep.mubr.f32.mxu0 0.0
  %1950 = vmatmul.mubr.f32.gmra.mrb[0].mxu0 %v1883
  %v1951 = vpop.f32.mrb[0].mxu0
  %v1952 = vadd.f32 0.0, %v1951
  %v1953 = vpop.f32.mrb[0].mxu0
  %1954 = vdwg.mxu0
  %v1955 = vadd.f32 %v1879, %v1952
  %v1956 = vxor.u32 %v1955, 2147483648
  %v1957 = vmul.f32 %v1956, 1.442695
  %v1958 = vpow.pop %v1957
  %v1959 = vadd.f32 %v1958, 1.0
  %v1960 = vrcp.pop %v1959
  %v1961 = vmul.f32 1.0, %v1960
  %v1962 = vtanh.pop %v1955
  %v1963 = vmul.f32 %v1961, %v1872
  %1965 = vrot.lane.b32.xlu0 %v1962, 64
  %v1966 = vpop.permute.xlu0 %1965
  %v1968 = vmul.f32 %v1961, %v1966
  %1970 = vrot.lane.b32.xlu0 %v1968, 32
  %v1971 = vpop.permute.xlu0 %1970
  %v1973 = vadd.f32 %v1963, %v1971
  %v1974 = vtanh.pop %v1973
  %1976 = vrot.lane.b32.xlu0 %v1974, 64
  %v1977 = vpop.permute.xlu0 %1976
  %v1979 = vmul.f32 %v1961, %v1977
  %v1980 = vld [vmem:[%s7] sm:$0xff]
  %v1981 = vld [vmem:[%s7 + $0x8] sm:$0xff]
  %v1982 = vld [vmem:[%s7 + $0x10] sm:$0xff]
  %v1983 = vld [vmem:[%s7 + $0x18] sm:$0xff]
  %v1984 = vld [vmem:[%s8] sm:$0x1]
  %v1986 = vlaneseq
  %v1987 = vshrl.u32 %v1986, 7
  %v1988 = vsub.s32 0, %v1987
  %v1989 = vrot.slane %v1984, %v1988
  %1992 = vrot.lane.b32.xlu0 %v1979, 32
  %v1993 = vpop.permute.xlu0 %1992
  %v1994 = vsel %vm192, %v1993, 0
  %1996 = vmatprep.subr.mxu0 0.0
  %1997 = vmatpush1.msra.mxu0 %v1980
  %1998 = vmatprep.subr.mxu0 0.0
  %1999 = vmatpush1.msra.mxu0 %v1981
  %2000 = vmatprep.subr.mxu0 0.0
  %2001 = vmatpush1.msra.mxu0 %v1982
  %2002 = vmatprep.subr.mxu0 0.0
  %2003 = vmatpush1.msra.mxu0 %v1983
  %2004 = vmatprep.subr.mxu0 0.0
  %2005 = vmatpush1.msra.mxu0 0.0
  %2006 = vmatprep.subr.mxu0 0.0
  %2007 = vmatpush1.msra.mxu0 0.0
  %2008 = vmatprep.subr.mxu0 0.0
  %2009 = vmatpush1.msra.mxu0 0.0
  %2010 = vmatprep.subr.mxu0 0.0
  %2011 = vmatpush1.msra.mxu0 0.0
  %2012 = vmatprep.subr.mxu0 0.0
  %2013 = vmatpush1.msra.mxu0 0.0
  %2014 = vmatprep.subr.mxu0 0.0
  %2015 = vmatpush1.msra.mxu0 0.0
  %2016 = vmatprep.subr.mxu0 0.0
  %2017 = vmatpush1.msra.mxu0 0.0
  %2018 = vmatprep.subr.mxu0 0.0
  %2019 = vmatpush1.msra.mxu0 0.0
  %2020 = vmatprep.subr.mxu0 0.0
  %2021 = vmatpush1.msra.mxu0 0.0
  %2022 = vmatprep.subr.mxu0 0.0
  %2023 = vmatpush1.msra.mxu0 0.0
  %2024 = vmatprep.subr.mxu0 0.0
  %2025 = vmatpush1.msra.mxu0 0.0
  %2026 = vmatprep.subr.mxu0 0.0
  %2027 = vmatpush1.msra.mxu0 0.0
  %2028 = vmatprep.subr.mxu0 0.0
  %2029 = vmatpush1.msra.mxu0 0.0
  %2030 = vmatprep.subr.mxu0 0.0
  %2031 = vmatpush1.msra.mxu0 0.0
  %2032 = vmatprep.subr.mxu0 0.0
  %2033 = vmatpush1.msra.mxu0 0.0
  %2034 = vmatprep.subr.mxu0 0.0
  %2035 = vmatpush1.msra.mxu0 0.0
  %2036 = vmatprep.subr.mxu0 0.0
  %2037 = vmatpush1.msra.mxu0 0.0
  %2038 = vmatprep.subr.mxu0 0.0
  %2039 = vmatpush1.msra.mxu0 0.0
  %2040 = vmatprep.subr.mxu0 0.0
  %2041 = vmatpush1.msra.mxu0 0.0
  %2042 = vmatprep.subr.mxu0 0.0
  %2043 = vmatpush1.msra.mxu0 0.0
  %2044 = vmatprep.subr.mxu0 0.0
  %2045 = vmatpush1.msra.mxu0 0.0
  %2046 = vmatprep.subr.mxu0 0.0
  %2047 = vmatpush1.msra.mxu0 0.0
  %2048 = vmatprep.subr.mxu0 0.0
  %2049 = vmatpush1.msra.mxu0 0.0
  %2050 = vmatprep.subr.mxu0 0.0
  %2051 = vmatpush1.msra.mxu0 0.0
  %2052 = vmatprep.subr.mxu0 0.0
  %2053 = vmatpush1.msra.mxu0 0.0
  %2054 = vmatprep.subr.mxu0 0.0
  %2055 = vmatpush1.msra.mxu0 0.0
  %2056 = vmatprep.subr.mxu0 0.0
  %2057 = vmatpush1.msra.mxu0 0.0
  %2058 = vmatprep.subr.mxu0 0.0
  %2059 = vmatpush1.msra.mxu0 0.0
  %2060 = vmatprep.mubr.f32.mxu0 0.0
  %2061 = vmatmul.mubr.f32.gmra.mrb[0].mxu0 %v1994
  %v2062 = vpop.f32.mrb[0].mxu0
  %v2063 = vadd.f32 %v1989, %v2062
  %v2064 = vpop.f32.mrb[0].mxu0
  %2065 = vdwg.mxu0
  %vm2066 = vcmask 31744
  %2067 = vst.msk [vmem:[%s9] sm:$0xff] %vm2066, %v2063
  // Predicated region
  $region38: #{tpu_custom_call.1} parent=0 // pred_check
    _
  $region39: #{tpu_custom_call.1} parent=0 // pred_check_branch
    %2069 = sbr.rel (0) target = $region41
  $region40: #{tpu_custom_call.1} parent=0 // pred_region
    _
  $region41: #{tpu_custom_call.1} parent=0 // pred_fallthru
    _
  // Predicated region
  $region42: #{tpu_custom_call.1} parent=0 // pred_check
    _
  $region43: #{tpu_custom_call.1} parent=0 // pred_check_branch
    %2071 = sbr.rel (0) target = $region45
  $region44: #{tpu_custom_call.1} parent=0 // pred_region
    _
  $region45: #{tpu_custom_call.1} parent=0 // pred_fallthru
    _

</llo_original>
